<compile_context>
chip_gen: v7x
topology: tpu7x:2x2x1
jax: 0.10.0
libtpu: 0.0.40
codegen_flags: <defaults>
</compile_context>

<pallas_src>
import functools
import math

import jax
import jax.numpy as jnp
from jax.experimental import pallas as pl
from jax.experimental.pallas import tpu as pltpu


# ----------------------------------------------------------------------------
# Fused Pallas kernel
# ----------------------------------------------------------------------------

def _mha_kernel(valid_ref, q_ref, k_ref, v_ref,
                wq_ref, wk_ref, wv_ref, wo_ref, o_ref, *, num_heads):
    """Fused multi-head attention forward.

    valid_ref : (B,)       int32  SMEM  -- valid key length per batch row
    q_ref     : (B*Lq, Dq) f32    VMEM
    k_ref     : (B*Lk, Dk) f32    VMEM
    v_ref     : (B*Lk, Dv) f32    VMEM
    w*_ref    : (D*, H) / (H, H)  VMEM
    o_ref     : (B*Lq, H)  f32    VMEM
    """
    B = valid_ref.shape[0]
    H = wq_ref.shape[1]
    Lq = q_ref.shape[0] // B
    Lk = k_ref.shape[0] // B
    d = H // num_heads
    scale = 1.0 / math.sqrt(d)
    bf16 = jnp.bfloat16

    # ---- fused Q/K/V projections: bf16 operands -> f32 accumulation (MXU) ----
    q = jnp.dot(q_ref[...].astype(bf16), wq_ref[...].astype(bf16),
                preferred_element_type=jnp.float32)            # (B*Lq, H)
    k = jnp.dot(k_ref[...].astype(bf16), wk_ref[...].astype(bf16),
                preferred_element_type=jnp.float32)            # (B*Lk, H)
    v = jnp.dot(v_ref[...].astype(bf16), wv_ref[...].astype(bf16),
                preferred_element_type=jnp.float32)            # (B*Lk, H)

    # fold 1/sqrt(d) into q once (small VPU multiply on the (B*Lq, H) tile)
    q = q * scale

    ctx_rows = []
    for b in range(B):                                  # static, fully unrolled
        qb = q[b * Lq:(b + 1) * Lq, :]                  # (Lq, H)
        kb = k[b * Lk:(b + 1) * Lk, :]                  # (Lk, H)
        vb = v[b * Lk:(b + 1) * Lk, :]                  # (Lk, H)

        # split heads via static lane slices; batch all heads into one 3-D matmul
        qh = jnp.stack([qb[:, h * d:(h + 1) * d] for h in range(num_heads)], axis=0)
        kh = jnp.stack([kb[:, h * d:(h + 1) * d] for h in range(num_heads)], axis=0)
        vh = jnp.stack([vb[:, h * d:(h + 1) * d] for h in range(num_heads)], axis=0)

        # scores[h, i, j]: batched contraction over the last dims (no K^T transpose)
        scores = jax.lax.dot_general(
            qh.astype(bf16), kh.astype(bf16),
            dimension_numbers=(((2,), (2,)), ((0,), (0,))),
            preferred_element_type=jnp.float32)         # (heads, Lq, Lk) f32

        # masked softmax (d2l semantics: invalid positions set to -1e6), all f32
        vl_b = valid_ref[b]
        col = jax.lax.broadcasted_iota(jnp.int32, scores.shape, 2)
        scores = jnp.where(col < vl_b, scores, -1e6)

        m = jnp.max(scores, axis=-1, keepdims=True)
        e = jnp.exp(scores - m)
        s = jnp.sum(e, axis=-1, keepdims=True)
        attn = e * pl.reciprocal(s, approx=True)        # EUP vrcp, f32
        # TODO(synk): dropout on attention weights omitted (eval mode / rate 0).

        ctx = jax.lax.dot_general(
            attn.astype(bf16), vh.astype(bf16),
            dimension_numbers=(((2,), (1,)), ((0,), (0,))),
            preferred_element_type=jnp.float32)         # (heads, Lq, d) f32

        # merge heads back on the lane axis -> (Lq, H)
        ctx_rows.append(
            jnp.concatenate([ctx[h] for h in range(num_heads)], axis=-1))

    ctx_all = jnp.concatenate(ctx_rows, axis=0)         # (B*Lq, H) f32

    # ---- output projection, fused into the same kernel ----
    out = jnp.dot(ctx_all.astype(bf16), wo_ref[...].astype(bf16),
                  preferred_element_type=jnp.float32)   # (B*Lq, H)
    o_ref[...] = out.astype(o_ref.dtype)


def multi_head_attention(params, queries, keys, values, valid_lens, num_heads):
    """queries: (B, Lq, Dq), keys/values: (B, Lk, Dk/Dv), valid_lens: (B,) or None."""
    B, Lq, Dq = queries.shape
    _, Lk, Dk = keys.shape
    Dv = values.shape[2]
    H = params["W_q"].shape[1]

    if valid_lens is None:
        valid_lens = jnp.full((B,), Lk, dtype=jnp.int32)
    # TODO(synk): 2-D (per-query) valid_lens variant of d2l.masked_softmax not supported.

    kernel = functools.partial(_mha_kernel, num_heads=num_heads)
    out2d = pl.pallas_call(
        kernel,
        out_shape=jax.ShapeDtypeStruct((B * Lq, H), queries.dtype),
        in_specs=[pl.BlockSpec(memory_space=pltpu.MemorySpace.SMEM)]
                + [pl.BlockSpec(memory_space=pltpu.MemorySpace.VMEM)] * 7,
        out_specs=pl.BlockSpec(memory_space=pltpu.MemorySpace.VMEM),
    )(
        valid_lens.astype(jnp.int32),
        queries.reshape(B * Lq, Dq),
        keys.reshape(B * Lk, Dk),
        values.reshape(B * Lk, Dv),
        params["W_q"], params["W_k"], params["W_v"], params["W_o"],
    )
    return out2d.reshape(B, Lq, H)


# ----------------------------------------------------------------------------
# Parameter init + pure-JAX (f32) reference for a correctness sanity check
# ----------------------------------------------------------------------------

def init_params(key, key_size, query_size, value_size, num_hiddens):
    ks = jax.random.split(key, 4)
    scale = 0.02
    return {
        "W_q": scale * jax.random.normal(ks[0], (query_size, num_hiddens), jnp.float32),
        "W_k": scale * jax.random.normal(ks[1], (key_size, num_hiddens), jnp.float32),
        "W_v": scale * jax.random.normal(ks[2], (value_size, num_hiddens), jnp.float32),
        "W_o": scale * jax.random.normal(ks[3], (num_hiddens, num_hiddens), jnp.float32),
    }


def transpose_qkv(X, num_heads):
    B, L, H = X.shape
    X = X.reshape(B, L, num_heads, H // num_heads)
    X = jnp.transpose(X, (0, 2, 1, 3))
    return X.reshape(B * num_heads, L, H // num_heads)


def transpose_output(X, num_heads):
    BH, L, d = X.shape
    X = X.reshape(BH // num_heads, num_heads, L, d)
    X = jnp.transpose(X, (0, 2, 1, 3))
    return X.reshape(X.shape[0], X.shape[1], -1)


def reference_forward(params, queries, keys, values, valid_lens, num_heads):
    B, Lq, _ = queries.shape
    _, Lk, _ = keys.shape
    q = transpose_qkv(queries @ params["W_q"], num_heads)
    k = transpose_qkv(keys @ params["W_k"], num_heads)
    v = transpose_qkv(values @ params["W_v"], num_heads)
    vl = jnp.repeat(valid_lens.astype(jnp.int32), num_heads, axis=0)
    d = q.shape[-1]
    scores = jnp.einsum("bqd,bkd->bqk", q, k) / math.sqrt(d)
    col = jnp.arange(Lk)[None, None, :]
    scores = jnp.where(col < vl[:, None, None], scores, -1e6)
    w = jax.nn.softmax(scores, axis=-1)
    out = jnp.einsum("bqk,bkd->bqd", w, v)
    return transpose_output(out, num_heads) @ params["W_o"]


# ----------------------------------------------------------------------------

if __name__ == "__main__":
    key = jax.random.PRNGKey(0)
    k_params, k_q, k_k, k_v = jax.random.split(key, 4)

    # Small shapes consistent with the module's forward:
    B, Lq, Lk = 2, 8, 8
    key_size = query_size = value_size = num_hiddens = 32
    num_heads = 4

    params = init_params(k_params, key_size, query_size, value_size, num_hiddens)

    queries = jax.random.normal(k_q, (B, Lq, query_size), jnp.float32)
    keys = jax.random.normal(k_k, (B, Lk, key_size), jnp.float32)
    values = jax.random.normal(k_v, (B, Lk, value_size), jnp.float32)
    valid_lens = jnp.array([3, 8], dtype=jnp.int32)  # shape (B,)

    out = multi_head_attention(params, queries, keys, values, valid_lens, num_heads)
    out = jax.block_until_ready(out)

    ref = reference_forward(params, queries, keys, values, valid_lens, num_heads)
    assert out.shape == (B, Lq, num_hiddens)
    # kernel uses bf16 MXU operands (f32 accumulate) -> modest tolerance vs f32 ref
    assert jnp.allclose(out, ref, atol=2e-3, rtol=2e-2), float(jnp.max(jnp.abs(out - ref)))

    print("KERNEL_OK")
</pallas_src>

<mosaic_0001>
module attributes {stable_mosaic.version = 11 : i64} {
  func.func @_mha_kernel(%arg0: memref<2xi32, #tpu.memory_space<smem>>, %arg1: memref<16x32xf32, #tpu.memory_space<vmem>>, %arg2: memref<16x32xf32, #tpu.memory_space<vmem>>, %arg3: memref<16x32xf32, #tpu.memory_space<vmem>>, %arg4: memref<32x32xf32, #tpu.memory_space<vmem>>, %arg5: memref<32x32xf32, #tpu.memory_space<vmem>>, %arg6: memref<32x32xf32, #tpu.memory_space<vmem>>, %arg7: memref<32x32xf32, #tpu.memory_space<vmem>>, %arg8: memref<16x32xf32, #tpu.memory_space<vmem>>) attributes {dimension_semantics = [], scalar_prefetch = 0 : i64, scratch_operands = 0 : i64, tpu.core_type = #tpu.core_type<tc>} {
    %c0 = arith.constant 0 : index
    %c0_0 = arith.constant 0 : index
    %0 = vector.load %arg1[%c0, %c0_0] : memref<16x32xf32, #tpu.memory_space<vmem>>, vector<16x32xf32>
    %1 = arith.truncf %0 : vector<16x32xf32> to vector<16x32xbf16>
    %c0_1 = arith.constant 0 : index
    %c0_2 = arith.constant 0 : index
    %2 = vector.load %arg4[%c0_1, %c0_2] : memref<32x32xf32, #tpu.memory_space<vmem>>, vector<32x32xf32>
    %3 = arith.truncf %2 : vector<32x32xf32> to vector<32x32xbf16>
    %cst = arith.constant dense<0.000000e+00> : vector<16x32xf32>
    %4 = tpu.matmul %1, %3, %cst {dimension_numbers = #tpu.dot_dimension_numbers<[1], [0], [0], [1], [0, 0, 1, 1], [], []>} : vector<16x32xbf16>, vector<32x32xbf16>, vector<16x32xf32> -> vector<16x32xf32>
    %c0_3 = arith.constant 0 : index
    %c0_4 = arith.constant 0 : index
    %5 = vector.load %arg2[%c0_3, %c0_4] : memref<16x32xf32, #tpu.memory_space<vmem>>, vector<16x32xf32>
    %6 = arith.truncf %5 : vector<16x32xf32> to vector<16x32xbf16>
    %c0_5 = arith.constant 0 : index
    %c0_6 = arith.constant 0 : index
    %7 = vector.load %arg5[%c0_5, %c0_6] : memref<32x32xf32, #tpu.memory_space<vmem>>, vector<32x32xf32>
    %8 = arith.truncf %7 : vector<32x32xf32> to vector<32x32xbf16>
    %cst_7 = arith.constant dense<0.000000e+00> : vector<16x32xf32>
    %9 = tpu.matmul %6, %8, %cst_7 {dimension_numbers = #tpu.dot_dimension_numbers<[1], [0], [0], [1], [0, 0, 1, 1], [], []>} : vector<16x32xbf16>, vector<32x32xbf16>, vector<16x32xf32> -> vector<16x32xf32>
    %c0_8 = arith.constant 0 : index
    %c0_9 = arith.constant 0 : index
    %10 = vector.load %arg3[%c0_8, %c0_9] : memref<16x32xf32, #tpu.memory_space<vmem>>, vector<16x32xf32>
    %11 = arith.truncf %10 : vector<16x32xf32> to vector<16x32xbf16>
    %c0_10 = arith.constant 0 : index
    %c0_11 = arith.constant 0 : index
    %12 = vector.load %arg6[%c0_10, %c0_11] : memref<32x32xf32, #tpu.memory_space<vmem>>, vector<32x32xf32>
    %13 = arith.truncf %12 : vector<32x32xf32> to vector<32x32xbf16>
    %cst_12 = arith.constant dense<0.000000e+00> : vector<16x32xf32>
    %14 = tpu.matmul %11, %13, %cst_12 {dimension_numbers = #tpu.dot_dimension_numbers<[1], [0], [0], [1], [0, 0, 1, 1], [], []>} : vector<16x32xbf16>, vector<32x32xbf16>, vector<16x32xf32> -> vector<16x32xf32>
    %cst_13 = arith.constant 0.353553385 : f32
    %15 = vector.broadcast %cst_13 : f32 to vector<16x32xf32>
    %16 = arith.mulf %4, %15 : vector<16x32xf32>
    %17 = vector.extract_strided_slice %16 {offsets = [0, 0], sizes = [8, 32], strides = [1, 1]} : vector<16x32xf32> to vector<8x32xf32>
    %18 = vector.extract_strided_slice %9 {offsets = [0, 0], sizes = [8, 32], strides = [1, 1]} : vector<16x32xf32> to vector<8x32xf32>
    %19 = vector.extract_strided_slice %14 {offsets = [0, 0], sizes = [8, 32], strides = [1, 1]} : vector<16x32xf32> to vector<8x32xf32>
    %20 = vector.extract_strided_slice %17 {offsets = [0, 0], sizes = [8, 8], strides = [1, 1]} : vector<8x32xf32> to vector<8x8xf32>
    %21 = vector.extract_strided_slice %17 {offsets = [0, 8], sizes = [8, 8], strides = [1, 1]} : vector<8x32xf32> to vector<8x8xf32>
    %22 = vector.extract_strided_slice %17 {offsets = [0, 16], sizes = [8, 8], strides = [1, 1]} : vector<8x32xf32> to vector<8x8xf32>
    %23 = vector.extract_strided_slice %17 {offsets = [0, 24], sizes = [8, 8], strides = [1, 1]} : vector<8x32xf32> to vector<8x8xf32>
    %24 = vector.shape_cast %20 : vector<8x8xf32> to vector<1x8x8xf32>
    %25 = vector.shape_cast %21 : vector<8x8xf32> to vector<1x8x8xf32>
    %26 = vector.shape_cast %22 : vector<8x8xf32> to vector<1x8x8xf32>
    %27 = vector.shape_cast %23 : vector<8x8xf32> to vector<1x8x8xf32>
    %28 = tpu.concatenate %24, %25, %26, %27 in 0 : vector<1x8x8xf32>, vector<1x8x8xf32>, vector<1x8x8xf32>, vector<1x8x8xf32> -> vector<4x8x8xf32>
    %29 = vector.extract_strided_slice %18 {offsets = [0, 0], sizes = [8, 8], strides = [1, 1]} : vector<8x32xf32> to vector<8x8xf32>
    %30 = vector.extract_strided_slice %18 {offsets = [0, 8], sizes = [8, 8], strides = [1, 1]} : vector<8x32xf32> to vector<8x8xf32>
    %31 = vector.extract_strided_slice %18 {offsets = [0, 16], sizes = [8, 8], strides = [1, 1]} : vector<8x32xf32> to vector<8x8xf32>
    %32 = vector.extract_strided_slice %18 {offsets = [0, 24], sizes = [8, 8], strides = [1, 1]} : vector<8x32xf32> to vector<8x8xf32>
    %33 = vector.shape_cast %29 : vector<8x8xf32> to vector<1x8x8xf32>
    %34 = vector.shape_cast %30 : vector<8x8xf32> to vector<1x8x8xf32>
    %35 = vector.shape_cast %31 : vector<8x8xf32> to vector<1x8x8xf32>
    %36 = vector.shape_cast %32 : vector<8x8xf32> to vector<1x8x8xf32>
    %37 = tpu.concatenate %33, %34, %35, %36 in 0 : vector<1x8x8xf32>, vector<1x8x8xf32>, vector<1x8x8xf32>, vector<1x8x8xf32> -> vector<4x8x8xf32>
    %38 = vector.extract_strided_slice %19 {offsets = [0, 0], sizes = [8, 8], strides = [1, 1]} : vector<8x32xf32> to vector<8x8xf32>
    %39 = vector.extract_strided_slice %19 {offsets = [0, 8], sizes = [8, 8], strides = [1, 1]} : vector<8x32xf32> to vector<8x8xf32>
    %40 = vector.extract_strided_slice %19 {offsets = [0, 16], sizes = [8, 8], strides = [1, 1]} : vector<8x32xf32> to vector<8x8xf32>
    %41 = vector.extract_strided_slice %19 {offsets = [0, 24], sizes = [8, 8], strides = [1, 1]} : vector<8x32xf32> to vector<8x8xf32>
    %42 = vector.shape_cast %38 : vector<8x8xf32> to vector<1x8x8xf32>
    %43 = vector.shape_cast %39 : vector<8x8xf32> to vector<1x8x8xf32>
    %44 = vector.shape_cast %40 : vector<8x8xf32> to vector<1x8x8xf32>
    %45 = vector.shape_cast %41 : vector<8x8xf32> to vector<1x8x8xf32>
    %46 = tpu.concatenate %42, %43, %44, %45 in 0 : vector<1x8x8xf32>, vector<1x8x8xf32>, vector<1x8x8xf32>, vector<1x8x8xf32> -> vector<4x8x8xf32>
    %47 = arith.truncf %28 : vector<4x8x8xf32> to vector<4x8x8xbf16>
    %48 = arith.truncf %37 : vector<4x8x8xf32> to vector<4x8x8xbf16>
    %cst_14 = arith.constant dense<0.000000e+00> : vector<4x8x8xf32>
    %49 = tpu.matmul %47, %48, %cst_14 {dimension_numbers = #tpu.dot_dimension_numbers<[2], [2], [1], [1], [0, 0, 0, 1, 1, 1], [0], [0]>} : vector<4x8x8xbf16>, vector<4x8x8xbf16>, vector<4x8x8xf32> -> vector<4x8x8xf32>
    %c0_15 = arith.constant 0 : index
    %50 = memref.load %arg0[%c0_15] : memref<2xi32, #tpu.memory_space<smem>>
    %51 = tpu.iota {dimensions = array<i32: 2>} : vector<4x8x8xi32>
    %52 = vector.broadcast %50 : i32 to vector<4x8x8xi32>
    %53 = arith.cmpi slt, %51, %52 : vector<4x8x8xi32>
    %cst_16 = arith.constant -1.000000e+06 : f32
    %54 = vector.broadcast %cst_16 : f32 to vector<4x8x8xf32>
    %55 = arith.select %53, %49, %54 : vector<4x8x8xi1>, vector<4x8x8xf32>
    %cst_17 = arith.constant dense<0xFF800000> : vector<4x8xf32>
    %56 = vector.multi_reduction <maximumf>, %55, %cst_17 [2] : vector<4x8x8xf32> to vector<4x8xf32>
    %57 = vector.shape_cast %56 : vector<4x8xf32> to vector<4x8x1xf32>
    %58 = vector.broadcast %57 : vector<4x8x1xf32> to vector<4x8x8xf32>
    %59 = arith.subf %55, %58 : vector<4x8x8xf32>
    %60 = math.exp %59 : vector<4x8x8xf32>
    %cst_18 = arith.constant dense<0.000000e+00> : vector<4x8xf32>
    %61 = vector.multi_reduction <add>, %60, %cst_18 [2] : vector<4x8x8xf32> to vector<4x8xf32>
    %62 = vector.shape_cast %61 : vector<4x8xf32> to vector<4x8x1xf32>
    %63 = tpu.reciprocal %62 {approx = true} : vector<4x8x1xf32> -> vector<4x8x1xf32>
    %64 = vector.broadcast %63 : vector<4x8x1xf32> to vector<4x8x8xf32>
    %65 = arith.mulf %60, %64 : vector<4x8x8xf32>
    %66 = arith.truncf %65 : vector<4x8x8xf32> to vector<4x8x8xbf16>
    %67 = arith.truncf %46 : vector<4x8x8xf32> to vector<4x8x8xbf16>
    %cst_19 = arith.constant dense<0.000000e+00> : vector<4x8x8xf32>
    %68 = tpu.matmul %66, %67, %cst_19 {dimension_numbers = #tpu.dot_dimension_numbers<[2], [1], [1], [2], [0, 0, 0, 1, 1, 2], [0], [0]>} : vector<4x8x8xbf16>, vector<4x8x8xbf16>, vector<4x8x8xf32> -> vector<4x8x8xf32>
    %69 = vector.extract_strided_slice %68 {offsets = [0, 0, 0], sizes = [1, 8, 8], strides = [1, 1, 1]} : vector<4x8x8xf32> to vector<1x8x8xf32>
    %70 = vector.shape_cast %69 : vector<1x8x8xf32> to vector<8x8xf32>
    %71 = vector.extract_strided_slice %68 {offsets = [1, 0, 0], sizes = [1, 8, 8], strides = [1, 1, 1]} : vector<4x8x8xf32> to vector<1x8x8xf32>
    %72 = vector.shape_cast %71 : vector<1x8x8xf32> to vector<8x8xf32>
    %73 = vector.extract_strided_slice %68 {offsets = [2, 0, 0], sizes = [1, 8, 8], strides = [1, 1, 1]} : vector<4x8x8xf32> to vector<1x8x8xf32>
    %74 = vector.shape_cast %73 : vector<1x8x8xf32> to vector<8x8xf32>
    %75 = vector.extract_strided_slice %68 {offsets = [3, 0, 0], sizes = [1, 8, 8], strides = [1, 1, 1]} : vector<4x8x8xf32> to vector<1x8x8xf32>
    %76 = vector.shape_cast %75 : vector<1x8x8xf32> to vector<8x8xf32>
    %77 = tpu.concatenate %70, %72, %74, %76 in 1 : vector<8x8xf32>, vector<8x8xf32>, vector<8x8xf32>, vector<8x8xf32> -> vector<8x32xf32>
    %78 = vector.extract_strided_slice %16 {offsets = [8, 0], sizes = [8, 32], strides = [1, 1]} : vector<16x32xf32> to vector<8x32xf32>
    %79 = vector.extract_strided_slice %9 {offsets = [8, 0], sizes = [8, 32], strides = [1, 1]} : vector<16x32xf32> to vector<8x32xf32>
    %80 = vector.extract_strided_slice %14 {offsets = [8, 0], sizes = [8, 32], strides = [1, 1]} : vector<16x32xf32> to vector<8x32xf32>
    %81 = vector.extract_strided_slice %78 {offsets = [0, 0], sizes = [8, 8], strides = [1, 1]} : vector<8x32xf32> to vector<8x8xf32>
    %82 = vector.extract_strided_slice %78 {offsets = [0, 8], sizes = [8, 8], strides = [1, 1]} : vector<8x32xf32> to vector<8x8xf32>
    %83 = vector.extract_strided_slice %78 {offsets = [0, 16], sizes = [8, 8], strides = [1, 1]} : vector<8x32xf32> to vector<8x8xf32>
    %84 = vector.extract_strided_slice %78 {offsets = [0, 24], sizes = [8, 8], strides = [1, 1]} : vector<8x32xf32> to vector<8x8xf32>
    %85 = vector.shape_cast %81 : vector<8x8xf32> to vector<1x8x8xf32>
    %86 = vector.shape_cast %82 : vector<8x8xf32> to vector<1x8x8xf32>
    %87 = vector.shape_cast %83 : vector<8x8xf32> to vector<1x8x8xf32>
    %88 = vector.shape_cast %84 : vector<8x8xf32> to vector<1x8x8xf32>
    %89 = tpu.concatenate %85, %86, %87, %88 in 0 : vector<1x8x8xf32>, vector<1x8x8xf32>, vector<1x8x8xf32>, vector<1x8x8xf32> -> vector<4x8x8xf32>
    %90 = vector.extract_strided_slice %79 {offsets = [0, 0], sizes = [8, 8], strides = [1, 1]} : vector<8x32xf32> to vector<8x8xf32>
    %91 = vector.extract_strided_slice %79 {offsets = [0, 8], sizes = [8, 8], strides = [1, 1]} : vector<8x32xf32> to vector<8x8xf32>
    %92 = vector.extract_strided_slice %79 {offsets = [0, 16], sizes = [8, 8], strides = [1, 1]} : vector<8x32xf32> to vector<8x8xf32>
    %93 = vector.extract_strided_slice %79 {offsets = [0, 24], sizes = [8, 8], strides = [1, 1]} : vector<8x32xf32> to vector<8x8xf32>
    %94 = vector.shape_cast %90 : vector<8x8xf32> to vector<1x8x8xf32>
    %95 = vector.shape_cast %91 : vector<8x8xf32> to vector<1x8x8xf32>
    %96 = vector.shape_cast %92 : vector<8x8xf32> to vector<1x8x8xf32>
    %97 = vector.shape_cast %93 : vector<8x8xf32> to vector<1x8x8xf32>
    %98 = tpu.concatenate %94, %95, %96, %97 in 0 : vector<1x8x8xf32>, vector<1x8x8xf32>, vector<1x8x8xf32>, vector<1x8x8xf32> -> vector<4x8x8xf32>
    %99 = vector.extract_strided_slice %80 {offsets = [0, 0], sizes = [8, 8], strides = [1, 1]} : vector<8x32xf32> to vector<8x8xf32>
    %100 = vector.extract_strided_slice %80 {offsets = [0, 8], sizes = [8, 8], strides = [1, 1]} : vector<8x32xf32> to vector<8x8xf32>
    %101 = vector.extract_strided_slice %80 {offsets = [0, 16], sizes = [8, 8], strides = [1, 1]} : vector<8x32xf32> to vector<8x8xf32>
    %102 = vector.extract_strided_slice %80 {offsets = [0, 24], sizes = [8, 8], strides = [1, 1]} : vector<8x32xf32> to vector<8x8xf32>
    %103 = vector.shape_cast %99 : vector<8x8xf32> to vector<1x8x8xf32>
    %104 = vector.shape_cast %100 : vector<8x8xf32> to vector<1x8x8xf32>
    %105 = vector.shape_cast %101 : vector<8x8xf32> to vector<1x8x8xf32>
    %106 = vector.shape_cast %102 : vector<8x8xf32> to vector<1x8x8xf32>
    %107 = tpu.concatenate %103, %104, %105, %106 in 0 : vector<1x8x8xf32>, vector<1x8x8xf32>, vector<1x8x8xf32>, vector<1x8x8xf32> -> vector<4x8x8xf32>
    %108 = arith.truncf %89 : vector<4x8x8xf32> to vector<4x8x8xbf16>
    %109 = arith.truncf %98 : vector<4x8x8xf32> to vector<4x8x8xbf16>
    %cst_20 = arith.constant dense<0.000000e+00> : vector<4x8x8xf32>
    %110 = tpu.matmul %108, %109, %cst_20 {dimension_numbers = #tpu.dot_dimension_numbers<[2], [2], [1], [1], [0, 0, 0, 1, 1, 1], [0], [0]>} : vector<4x8x8xbf16>, vector<4x8x8xbf16>, vector<4x8x8xf32> -> vector<4x8x8xf32>
    %c1 = arith.constant 1 : index
    %111 = memref.load %arg0[%c1] : memref<2xi32, #tpu.memory_space<smem>>
    %112 = tpu.iota {dimensions = array<i32: 2>} : vector<4x8x8xi32>
    %113 = vector.broadcast %111 : i32 to vector<4x8x8xi32>
    %114 = arith.cmpi slt, %112, %113 : vector<4x8x8xi32>
    %cst_21 = arith.constant -1.000000e+06 : f32
    %115 = vector.broadcast %cst_21 : f32 to vector<4x8x8xf32>
    %116 = arith.select %114, %110, %115 : vector<4x8x8xi1>, vector<4x8x8xf32>
    %cst_22 = arith.constant dense<0xFF800000> : vector<4x8xf32>
    %117 = vector.multi_reduction <maximumf>, %116, %cst_22 [2] : vector<4x8x8xf32> to vector<4x8xf32>
    %118 = vector.shape_cast %117 : vector<4x8xf32> to vector<4x8x1xf32>
    %119 = vector.broadcast %118 : vector<4x8x1xf32> to vector<4x8x8xf32>
    %120 = arith.subf %116, %119 : vector<4x8x8xf32>
    %121 = math.exp %120 : vector<4x8x8xf32>
    %cst_23 = arith.constant dense<0.000000e+00> : vector<4x8xf32>
    %122 = vector.multi_reduction <add>, %121, %cst_23 [2] : vector<4x8x8xf32> to vector<4x8xf32>
    %123 = vector.shape_cast %122 : vector<4x8xf32> to vector<4x8x1xf32>
    %124 = tpu.reciprocal %123 {approx = true} : vector<4x8x1xf32> -> vector<4x8x1xf32>
    %125 = vector.broadcast %124 : vector<4x8x1xf32> to vector<4x8x8xf32>
    %126 = arith.mulf %121, %125 : vector<4x8x8xf32>
    %127 = arith.truncf %126 : vector<4x8x8xf32> to vector<4x8x8xbf16>
    %128 = arith.truncf %107 : vector<4x8x8xf32> to vector<4x8x8xbf16>
    %cst_24 = arith.constant dense<0.000000e+00> : vector<4x8x8xf32>
    %129 = tpu.matmul %127, %128, %cst_24 {dimension_numbers = #tpu.dot_dimension_numbers<[2], [1], [1], [2], [0, 0, 0, 1, 1, 2], [0], [0]>} : vector<4x8x8xbf16>, vector<4x8x8xbf16>, vector<4x8x8xf32> -> vector<4x8x8xf32>
    %130 = vector.extract_strided_slice %129 {offsets = [0, 0, 0], sizes = [1, 8, 8], strides = [1, 1, 1]} : vector<4x8x8xf32> to vector<1x8x8xf32>
    %131 = vector.shape_cast %130 : vector<1x8x8xf32> to vector<8x8xf32>
    %132 = vector.extract_strided_slice %129 {offsets = [1, 0, 0], sizes = [1, 8, 8], strides = [1, 1, 1]} : vector<4x8x8xf32> to vector<1x8x8xf32>
    %133 = vector.shape_cast %132 : vector<1x8x8xf32> to vector<8x8xf32>
    %134 = vector.extract_strided_slice %129 {offsets = [2, 0, 0], sizes = [1, 8, 8], strides = [1, 1, 1]} : vector<4x8x8xf32> to vector<1x8x8xf32>
    %135 = vector.shape_cast %134 : vector<1x8x8xf32> to vector<8x8xf32>
    %136 = vector.extract_strided_slice %129 {offsets = [3, 0, 0], sizes = [1, 8, 8], strides = [1, 1, 1]} : vector<4x8x8xf32> to vector<1x8x8xf32>
    %137 = vector.shape_cast %136 : vector<1x8x8xf32> to vector<8x8xf32>
    %138 = tpu.concatenate %131, %133, %135, %137 in 1 : vector<8x8xf32>, vector<8x8xf32>, vector<8x8xf32>, vector<8x8xf32> -> vector<8x32xf32>
    %139 = tpu.concatenate %77, %138 in 0 : vector<8x32xf32>, vector<8x32xf32> -> vector<16x32xf32>
    %140 = arith.truncf %139 : vector<16x32xf32> to vector<16x32xbf16>
    %c0_25 = arith.constant 0 : index
    %c0_26 = arith.constant 0 : index
    %141 = vector.load %arg7[%c0_25, %c0_26] : memref<32x32xf32, #tpu.memory_space<vmem>>, vector<32x32xf32>
    %142 = arith.truncf %141 : vector<32x32xf32> to vector<32x32xbf16>
    %cst_27 = arith.constant dense<0.000000e+00> : vector<16x32xf32>
    %143 = tpu.matmul %140, %142, %cst_27 {dimension_numbers = #tpu.dot_dimension_numbers<[1], [0], [0], [1], [0, 0, 1, 1], [], []>} : vector<16x32xbf16>, vector<32x32xbf16>, vector<16x32xf32> -> vector<16x32xf32>
    %c0_28 = arith.constant 0 : index
    %c0_29 = arith.constant 0 : index
    %144 = vector.load %arg8[%c0_28, %c0_29] : memref<16x32xf32, #tpu.memory_space<vmem>>, vector<16x32xf32>
    tpu.vector_store %arg8[%c0_28, %c0_29], %143 {strides = array<i32>} : memref<16x32xf32, #tpu.memory_space<vmem>>, vector<16x32xf32>,
    return
  }
}

</mosaic_0001>

<llo_original>
// kernel: tpu_custom_call.1
$region0: #{tpu_custom_call.1}
  #allocation0 [shape = 'u32[]', space=smem, size = 0x4, offset = 0x4, fixed_abs, tag = 'smem constant byte address 0x4 - core index']
  #allocation1 [shape = 'u32[144,128]{1,0:T(1,128)}', space=vmem, size = 0x12000, scoped, tag = 'internal scratch']
  %s0 = inlined_call_operand.hbm [shape: s32[2], index: 0, kind: input, shape index: {}]
  %s1 = inlined_call_operand.hbm [shape: f32[16,32], index: 1, kind: input, shape index: {}]
  %s2 = inlined_call_operand.hbm [shape: f32[16,32], index: 2, kind: input, shape index: {}]
  %s3 = inlined_call_operand.hbm [shape: f32[16,32], index: 3, kind: input, shape index: {}]
  %s4 = inlined_call_operand.hbm [shape: f32[32,32], index: 4, kind: input, shape index: {}]
  %s5 = inlined_call_operand.hbm [shape: f32[32,32], index: 5, kind: input, shape index: {}]
  %s6 = inlined_call_operand.hbm [shape: f32[32,32], index: 6, kind: input, shape index: {}]
  %s7 = inlined_call_operand.hbm [shape: f32[32,32], index: 7, kind: input, shape index: {}]
  %s8 = inlined_call_operand.hbm [shape: f32[16,32], index: 8, kind: output, shape index: {}]
  %s9 = sld [smem:[#allocation0]]
  $region74: #{tpu_custom_call.1} parent=0
    _
  %s11 = ssub.s32 1, %s9
  %s12 = scalar_select 0, %s11, %s9
  $region1: #{tpu_custom_call.1} parent=0
    #allocation2 [shape = 'u8[512]{0}', space=smem, size = 0x200, scoped, tag = 'input window, operand 0, single buffered']
    #allocation3 [shape = 's32[1]{0}', space=sflag, size = 0x4, scoped, tag = 'scoped memory for tpu_custom_call.1']
    #allocation4 [shape = 's32[1]{0}', space=sflag, size = 0x4, scoped, tag = 'scoped memory for tpu_custom_call.1']
    #allocation5 [shape = 's32[1]{0}', space=sflag, size = 0x4, scoped, tag = 'scoped memory for tpu_custom_call.1']
    #allocation6 [shape = 'u8[8192]{0}', space=vmem, size = 0x2000, scoped, tag = 'input window, operand 1, single buffered']
    #allocation7 [shape = 'u8[8192]{0}', space=vmem, size = 0x2000, scoped, tag = 'input window, operand 2, single buffered']
    #allocation8 [shape = 's32[1]{0}', space=sflag, size = 0x4, scoped, tag = 'scoped memory for tpu_custom_call.1']
    #allocation9 [shape = 'u8[8192]{0}', space=vmem, size = 0x2000, scoped, tag = 'input window, operand 3, single buffered']
    #allocation10 [shape = 'u8[16384]{0}', space=vmem, size = 0x4000, scoped, tag = 'input window, operand 4, single buffered']
    #allocation11 [shape = 's32[1]{0}', space=sflag, size = 0x4, scoped, tag = 'scoped memory for tpu_custom_call.1']
    #allocation12 [shape = 'u8[16384]{0}', space=vmem, size = 0x4000, scoped, tag = 'input window, operand 5, single buffered']
    #allocation13 [shape = 'u8[16384]{0}', space=vmem, size = 0x4000, scoped, tag = 'input window, operand 6, single buffered']
    #allocation14 [shape = 's32[1]{0}', space=sflag, size = 0x4, scoped, tag = 'scoped memory for tpu_custom_call.1']
    #allocation15 [shape = 'u8[16384]{0}', space=vmem, size = 0x4000, scoped, tag = 'input window, operand 7, single buffered']
    #allocation16 [shape = 'u8[8192]{0}', space=vmem, size = 0x2000, scoped, tag = 'output window, operand 0, single buffered']
    %13 = vsyncpa [#allocation5], 0
    %14 = vsyncpa [#allocation3], 0
    %15 = vsyncpa [#allocation8], 0
    %16 = vsyncpa [#allocation11], 0
    %17 = vsyncpa [#allocation14], 0
    %18 = vsyncpa [#allocation4], 0
    // Predicated region
    $region2: #{tpu_custom_call.1} parent=1 // pred_check
      _
    $region3: #{tpu_custom_call.1} parent=1 // pred_check_branch
      %20 = sbr.rel (0) target = $region5
    $region4: #{tpu_custom_call.1} parent=1 // pred_region
      %s22 = ssub.s32 16, 16
      %23 = vsyncadd [#allocation5], %s22
      %26 = dma.hbm_to_smem %s0, 16, [#allocation2], [#allocation5]
    $region5: #{tpu_custom_call.1} parent=1 // pred_fallthru
      _
    // Predicated region
    $region6: #{tpu_custom_call.1} parent=1 // pred_check
      _
    $region7: #{tpu_custom_call.1} parent=1 // pred_check_branch
      %28 = sbr.rel (0) target = $region9
    $region8: #{tpu_custom_call.1} parent=1 // pred_region
      %s30 = ssub.s32 256, 256
      %31 = vsyncadd [#allocation3], %s30
      %s32 = sshll.u32 [#allocation6], 4
      %s33 = int_to_ptr.vmem [resolvable:$true] %s32
      %38 = dma.hbm_to_vmem [thread:$0]  %s1, 256, %s33, [#allocation3], 128, 128, 8
    $region9: #{tpu_custom_call.1} parent=1 // pred_fallthru
      _
    // Predicated region
    $region10: #{tpu_custom_call.1} parent=1 // pred_check
      _
    $region11: #{tpu_custom_call.1} parent=1 // pred_check_branch
      %40 = sbr.rel (0) target = $region13
    $region12: #{tpu_custom_call.1} parent=1 // pred_region
      %s42 = ssub.s32 256, 256
      %43 = vsyncadd [#allocation8], %s42
      %s44 = sshll.u32 [#allocation7], 4
      %s45 = int_to_ptr.vmem [resolvable:$true] %s44
      %50 = dma.hbm_to_vmem [thread:$0]  %s2, 256, %s45, [#allocation8], 128, 128, 8
    $region13: #{tpu_custom_call.1} parent=1 // pred_fallthru
      _
    // Predicated region
    $region14: #{tpu_custom_call.1} parent=1 // pred_check
      _
    $region15: #{tpu_custom_call.1} parent=1 // pred_check_branch
      %52 = sbr.rel (0) target = $region17
    $region16: #{tpu_custom_call.1} parent=1 // pred_region
      %s54 = ssub.s32 256, 256
      %55 = vsyncadd [#allocation8], %s54
      %s56 = sshll.u32 [#allocation9], 4
      %s57 = int_to_ptr.vmem [resolvable:$true] %s56
      %62 = dma.hbm_to_vmem [thread:$0]  %s3, 256, %s57, [#allocation8], 128, 128, 8
    $region17: #{tpu_custom_call.1} parent=1 // pred_fallthru
      _
    // Predicated region
    $region18: #{tpu_custom_call.1} parent=1 // pred_check
      _
    $region19: #{tpu_custom_call.1} parent=1 // pred_check_branch
      %64 = sbr.rel (0) target = $region21
    $region20: #{tpu_custom_call.1} parent=1 // pred_region
      %s66 = ssub.s32 512, 512
      %67 = vsyncadd [#allocation11], %s66
      %s68 = sshll.u32 [#allocation10], 4
      %s69 = int_to_ptr.vmem [resolvable:$true] %s68
      %74 = dma.hbm_to_vmem [thread:$0]  %s4, 512, %s69, [#allocation11], 128, 128, 8
    $region21: #{tpu_custom_call.1} parent=1 // pred_fallthru
      _
    // Predicated region
    $region22: #{tpu_custom_call.1} parent=1 // pred_check
      _
    $region23: #{tpu_custom_call.1} parent=1 // pred_check_branch
      %76 = sbr.rel (0) target = $region25
    $region24: #{tpu_custom_call.1} parent=1 // pred_region
      %s78 = ssub.s32 512, 512
      %79 = vsyncadd [#allocation11], %s78
      %s80 = sshll.u32 [#allocation12], 4
      %s81 = int_to_ptr.vmem [resolvable:$true] %s80
      %86 = dma.hbm_to_vmem [thread:$0]  %s5, 512, %s81, [#allocation11], 128, 128, 8
    $region25: #{tpu_custom_call.1} parent=1 // pred_fallthru
      _
    // Predicated region
    $region26: #{tpu_custom_call.1} parent=1 // pred_check
      _
    $region27: #{tpu_custom_call.1} parent=1 // pred_check_branch
      %88 = sbr.rel (0) target = $region29
    $region28: #{tpu_custom_call.1} parent=1 // pred_region
      %s90 = ssub.s32 512, 512
      %91 = vsyncadd [#allocation14], %s90
      %s92 = sshll.u32 [#allocation13], 4
      %s93 = int_to_ptr.vmem [resolvable:$true] %s92
      %98 = dma.hbm_to_vmem [thread:$0]  %s6, 512, %s93, [#allocation14], 128, 128, 8
    $region29: #{tpu_custom_call.1} parent=1 // pred_fallthru
      _
    // Predicated region
    $region30: #{tpu_custom_call.1} parent=1 // pred_check
      _
    $region31: #{tpu_custom_call.1} parent=1 // pred_check_branch
      %100 = sbr.rel (0) target = $region33
    $region32: #{tpu_custom_call.1} parent=1 // pred_region
      %s102 = ssub.s32 512, 512
      %103 = vsyncadd [#allocation14], %s102
      %s104 = sshll.u32 [#allocation15], 4
      %s105 = int_to_ptr.vmem [resolvable:$true] %s104
      %110 = dma.hbm_to_vmem [thread:$0]  %s7, 512, %s105, [#allocation14], 128, 128, 8
    $region33: #{tpu_custom_call.1} parent=1 // pred_fallthru
      _
    // Predicated region
    $region34: #{tpu_custom_call.1} parent=1 // pred_check
      _
    $region35: #{tpu_custom_call.1} parent=1 // pred_check_branch
      %112 = sbr.rel (0) target = $region37
    $region36: #{tpu_custom_call.1} parent=1 // pred_region
      %113 = dma.done [#allocation5], 16
    $region37: #{tpu_custom_call.1} parent=1 // pred_fallthru
      _
    // Predicated region
    $region38: #{tpu_custom_call.1} parent=1 // pred_check
      _
    $region39: #{tpu_custom_call.1} parent=1 // pred_check_branch
      %115 = sbr.rel (0) target = $region41
    $region40: #{tpu_custom_call.1} parent=1 // pred_region
      %116 = dma.done [#allocation3], 256
    $region41: #{tpu_custom_call.1} parent=1 // pred_fallthru
      _
    // Predicated region
    $region42: #{tpu_custom_call.1} parent=1 // pred_check
      _
    $region43: #{tpu_custom_call.1} parent=1 // pred_check_branch
      %118 = sbr.rel (0) target = $region45
    $region44: #{tpu_custom_call.1} parent=1 // pred_region
      %119 = dma.done [#allocation8], 256
    $region45: #{tpu_custom_call.1} parent=1 // pred_fallthru
      _
    // Predicated region
    $region46: #{tpu_custom_call.1} parent=1 // pred_check
      _
    $region47: #{tpu_custom_call.1} parent=1 // pred_check_branch
      %121 = sbr.rel (0) target = $region49
    $region48: #{tpu_custom_call.1} parent=1 // pred_region
      %122 = dma.done [#allocation8], 256
    $region49: #{tpu_custom_call.1} parent=1 // pred_fallthru
      _
    // Predicated region
    $region50: #{tpu_custom_call.1} parent=1 // pred_check
      _
    $region51: #{tpu_custom_call.1} parent=1 // pred_check_branch
      %124 = sbr.rel (0) target = $region53
    $region52: #{tpu_custom_call.1} parent=1 // pred_region
      %125 = dma.done [#allocation11], 512
    $region53: #{tpu_custom_call.1} parent=1 // pred_fallthru
      _
    // Predicated region
    $region54: #{tpu_custom_call.1} parent=1 // pred_check
      _
    $region55: #{tpu_custom_call.1} parent=1 // pred_check_branch
      %127 = sbr.rel (0) target = $region57
    $region56: #{tpu_custom_call.1} parent=1 // pred_region
      %128 = dma.done [#allocation11], 512
    $region57: #{tpu_custom_call.1} parent=1 // pred_fallthru
      _
    // Predicated region
    $region58: #{tpu_custom_call.1} parent=1 // pred_check
      _
    $region59: #{tpu_custom_call.1} parent=1 // pred_check_branch
      %130 = sbr.rel (0) target = $region61
    $region60: #{tpu_custom_call.1} parent=1 // pred_region
      %131 = dma.done [#allocation14], 512
    $region61: #{tpu_custom_call.1} parent=1 // pred_fallthru
      _
    // Predicated region
    $region62: #{tpu_custom_call.1} parent=1 // pred_check
      _
    $region63: #{tpu_custom_call.1} parent=1 // pred_check_branch
      %133 = sbr.rel (0) target = $region65
    $region64: #{tpu_custom_call.1} parent=1 // pred_region
      %134 = dma.done [#allocation14], 512
    $region65: #{tpu_custom_call.1} parent=1 // pred_fallthru
      _
    %135 = sfence
    %v137 = vld [vmem:[#allocation6] sm:$0xff]
    %v138 = vld [vmem:[#allocation6 + $0x8] sm:$0xff]
    %v139 = vpack.c.bf16 %v138, %v137
    %v140 = vld [vmem:[#allocation10] sm:$0xff]
    %v141 = vld [vmem:[#allocation10 + $0x8] sm:$0xff]
    %v142 = vld [vmem:[#allocation10 + $0x10] sm:$0xff]
    %v143 = vld [vmem:[#allocation10 + $0x18] sm:$0xff]
    %v144 = vpack.c.bf16 %v141, %v140
    %v145 = vpack.c.bf16 %v143, %v142
    %vm146 = vcmask 261120
    %v148 = vsel %vm146, %v139, 0
    %150 = vmatprep.subr.bf16.mxu0 0
    %151 = vmatpush1.bf16.msra.mxu0 %v144
    %152 = vmatprep.subr.bf16.mxu0 0
    %153 = vmatpush1.bf16.msra.mxu0 %v145
    %154 = vmatprep.subr.bf16.mxu0 0
    %155 = vmatpush1.bf16.msra.mxu0 0
    %156 = vmatprep.subr.bf16.mxu0 0
    %157 = vmatpush1.bf16.msra.mxu0 0
    %158 = vmatprep.subr.bf16.mxu0 0
    %159 = vmatpush1.bf16.msra.mxu0 0
    %160 = vmatprep.subr.bf16.mxu0 0
    %161 = vmatpush1.bf16.msra.mxu0 0
    %162 = vmatprep.subr.bf16.mxu0 0
    %163 = vmatpush1.bf16.msra.mxu0 0
    %164 = vmatprep.subr.bf16.mxu0 0
    %165 = vmatpush1.bf16.msra.mxu0 0
    %166 = vmatprep.subr.bf16.mxu0 0
    %167 = vmatpush1.bf16.msra.mxu0 0
    %168 = vmatprep.subr.bf16.mxu0 0
    %169 = vmatpush1.bf16.msra.mxu0 0
    %170 = vmatprep.subr.bf16.mxu0 0
    %171 = vmatpush1.bf16.msra.mxu0 0
    %172 = vmatprep.subr.bf16.mxu0 0
    %173 = vmatpush1.bf16.msra.mxu0 0
    %174 = vmatprep.subr.bf16.mxu0 0
    %175 = vmatpush1.bf16.msra.mxu0 0
    %176 = vmatprep.subr.bf16.mxu0 0
    %177 = vmatpush1.bf16.msra.mxu0 0
    %178 = vmatprep.subr.bf16.mxu0 0
    %179 = vmatpush1.bf16.msra.mxu0 0
    %180 = vmatprep.subr.bf16.mxu0 0
    %181 = vmatpush1.bf16.msra.mxu0 0
    %182 = vmatprep.mubr.bf16.mxu0 0
    %183 = vmatmul.mubr.bf16.gmra.mrb[0].mxu0 %v148
    %v184 = vpop.f32.mrb[0].mxu0
    %v185 = vadd.f32 0.0, %v184
    %v186 = vpop.f32.mrb[0].mxu0
    %v187 = vpop.f32.mrb[0].mxu0
    %v188 = vadd.f32 0.0, %v187
    %v189 = vpop.f32.mrb[0].mxu0
    %190 = vdwg.mxu0
    %v191 = vld [vmem:[#allocation7] sm:$0xff]
    %v192 = vld [vmem:[#allocation7 + $0x8] sm:$0xff]
    %v193 = vpack.c.bf16 %v192, %v191
    %v194 = vld [vmem:[#allocation12] sm:$0xff]
    %v195 = vld [vmem:[#allocation12 + $0x8] sm:$0xff]
    %v196 = vld [vmem:[#allocation12 + $0x10] sm:$0xff]
    %v197 = vld [vmem:[#allocation12 + $0x18] sm:$0xff]
    %v198 = vpack.c.bf16 %v195, %v194
    %v199 = vpack.c.bf16 %v197, %v196
    %v201 = vsel %vm146, %v193, 0
    %203 = vmatprep.subr.bf16.mxu0 0
    %204 = vmatpush1.bf16.msra.mxu0 %v198
    %205 = vmatprep.subr.bf16.mxu0 0
    %206 = vmatpush1.bf16.msra.mxu0 %v199
    %207 = vmatprep.subr.bf16.mxu0 0
    %208 = vmatpush1.bf16.msra.mxu0 0
    %209 = vmatprep.subr.bf16.mxu0 0
    %210 = vmatpush1.bf16.msra.mxu0 0
    %211 = vmatprep.subr.bf16.mxu0 0
    %212 = vmatpush1.bf16.msra.mxu0 0
    %213 = vmatprep.subr.bf16.mxu0 0
    %214 = vmatpush1.bf16.msra.mxu0 0
    %215 = vmatprep.subr.bf16.mxu0 0
    %216 = vmatpush1.bf16.msra.mxu0 0
    %217 = vmatprep.subr.bf16.mxu0 0
    %218 = vmatpush1.bf16.msra.mxu0 0
    %219 = vmatprep.subr.bf16.mxu0 0
    %220 = vmatpush1.bf16.msra.mxu0 0
    %221 = vmatprep.subr.bf16.mxu0 0
    %222 = vmatpush1.bf16.msra.mxu0 0
    %223 = vmatprep.subr.bf16.mxu0 0
    %224 = vmatpush1.bf16.msra.mxu0 0
    %225 = vmatprep.subr.bf16.mxu0 0
    %226 = vmatpush1.bf16.msra.mxu0 0
    %227 = vmatprep.subr.bf16.mxu0 0
    %228 = vmatpush1.bf16.msra.mxu0 0
    %229 = vmatprep.subr.bf16.mxu0 0
    %230 = vmatpush1.bf16.msra.mxu0 0
    %231 = vmatprep.subr.bf16.mxu0 0
    %232 = vmatpush1.bf16.msra.mxu0 0
    %233 = vmatprep.subr.bf16.mxu0 0
    %234 = vmatpush1.bf16.msra.mxu0 0
    %235 = vmatprep.mubr.bf16.mxu0 0
    %236 = vmatmul.mubr.bf16.gmra.mrb[0].mxu0 %v201
    %v237 = vpop.f32.mrb[0].mxu0
    %v238 = vadd.f32 0.0, %v237
    %v239 = vpop.f32.mrb[0].mxu0
    %v240 = vpop.f32.mrb[0].mxu0
    %v241 = vadd.f32 0.0, %v240
    %v242 = vpop.f32.mrb[0].mxu0
    %243 = vdwg.mxu0
    %v244 = vld [vmem:[#allocation9] sm:$0xff]
    %v245 = vld [vmem:[#allocation9 + $0x8] sm:$0xff]
    %v246 = vpack.c.bf16 %v245, %v244
    %v247 = vld [vmem:[#allocation13] sm:$0xff]
    %v248 = vld [vmem:[#allocation13 + $0x8] sm:$0xff]
    %v249 = vld [vmem:[#allocation13 + $0x10] sm:$0xff]
    %v250 = vld [vmem:[#allocation13 + $0x18] sm:$0xff]
    %v251 = vpack.c.bf16 %v248, %v247
    %v252 = vpack.c.bf16 %v250, %v249
    %v254 = vsel %vm146, %v246, 0
    %256 = vmatprep.subr.bf16.mxu0 0
    %257 = vmatpush1.bf16.msra.mxu0 %v251
    %258 = vmatprep.subr.bf16.mxu0 0
    %259 = vmatpush1.bf16.msra.mxu0 %v252
    %260 = vmatprep.subr.bf16.mxu0 0
    %261 = vmatpush1.bf16.msra.mxu0 0
    %262 = vmatprep.subr.bf16.mxu0 0
    %263 = vmatpush1.bf16.msra.mxu0 0
    %264 = vmatprep.subr.bf16.mxu0 0
    %265 = vmatpush1.bf16.msra.mxu0 0
    %266 = vmatprep.subr.bf16.mxu0 0
    %267 = vmatpush1.bf16.msra.mxu0 0
    %268 = vmatprep.subr.bf16.mxu0 0
    %269 = vmatpush1.bf16.msra.mxu0 0
    %270 = vmatprep.subr.bf16.mxu0 0
    %271 = vmatpush1.bf16.msra.mxu0 0
    %272 = vmatprep.subr.bf16.mxu0 0
    %273 = vmatpush1.bf16.msra.mxu0 0
    %274 = vmatprep.subr.bf16.mxu0 0
    %275 = vmatpush1.bf16.msra.mxu0 0
    %276 = vmatprep.subr.bf16.mxu0 0
    %277 = vmatpush1.bf16.msra.mxu0 0
    %278 = vmatprep.subr.bf16.mxu0 0
    %279 = vmatpush1.bf16.msra.mxu0 0
    %280 = vmatprep.subr.bf16.mxu0 0
    %281 = vmatpush1.bf16.msra.mxu0 0
    %282 = vmatprep.subr.bf16.mxu0 0
    %283 = vmatpush1.bf16.msra.mxu0 0
    %284 = vmatprep.subr.bf16.mxu0 0
    %285 = vmatpush1.bf16.msra.mxu0 0
    %286 = vmatprep.subr.bf16.mxu0 0
    %287 = vmatpush1.bf16.msra.mxu0 0
    %288 = vmatprep.mubr.bf16.mxu0 0
    %289 = vmatmul.mubr.bf16.gmra.mrb[0].mxu0 %v254
    %v290 = vpop.f32.mrb[0].mxu0
    %v291 = vadd.f32 0.0, %v290
    %v292 = vpop.f32.mrb[0].mxu0
    %v293 = vpop.f32.mrb[0].mxu0
    %v294 = vadd.f32 0.0, %v293
    %v295 = vpop.f32.mrb[0].mxu0
    %296 = vdwg.mxu0
    %v297 = vmul.f32 %v185, 0.35355338
    %v298 = vmul.f32 %v188, 0.35355338
    %300 = vrot.lane.b32.xlu0 %v297, 120
    %v301 = vpop.permute.xlu0 %300
    %303 = vrot.lane.b32.xlu0 %v297, 112
    %v304 = vpop.permute.xlu0 %303
    %306 = vrot.lane.b32.xlu0 %v297, 104
    %v307 = vpop.permute.xlu0 %306
    %310 = vrot.lane.b32.xlu0 %v238, 120
    %v311 = vpop.permute.xlu0 %310
    %313 = vrot.lane.b32.xlu0 %v238, 112
    %v314 = vpop.permute.xlu0 %313
    %316 = vrot.lane.b32.xlu0 %v238, 104
    %v317 = vpop.permute.xlu0 %316
    %320 = vrot.lane.b32.xlu0 %v291, 120
    %v321 = vpop.permute.xlu0 %320
    %323 = vrot.lane.b32.xlu0 %v291, 112
    %v324 = vpop.permute.xlu0 %323
    %326 = vrot.lane.b32.xlu0 %v291, 104
    %v327 = vpop.permute.xlu0 %326
    %v329 = vpack.c.bf16 %v297, %v297
    %v330 = vpack.c.bf16 %v301, %v301
    %v331 = vpack.c.bf16 %v304, %v304
    %v332 = vpack.c.bf16 %v307, %v307
    %v333 = vpack.c.bf16 %v238, %v238
    %v334 = vpack.c.bf16 %v311, %v311
    %v335 = vpack.c.bf16 %v314, %v314
    %v336 = vpack.c.bf16 %v317, %v317
    %vm337 = vcmask 64512
    %v339 = vsel %vm337, %v329, 0
    %v342 = vsel %vm337, %v333, 0
    %344 = vmatprep.subr.bf16.mxu0 0
    %345 = vmatpush1.bf16.xpose.msra.mxu0 %v342
    %346 = vmatprep.subr.bf16.mxu0 0
    %347 = vmatpush1.bf16.xpose.msra.mxu0 0
    %348 = vmatprep.subr.bf16.mxu0 0
    %349 = vmatpush1.bf16.xpose.msra.mxu0 0
    %350 = vmatprep.subr.bf16.mxu0 0
    %351 = vmatpush1.bf16.xpose.msra.mxu0 0
    %352 = vmatprep.subr.bf16.mxu0 0
    %353 = vmatpush1.bf16.xpose.msra.mxu0 0
    %354 = vmatprep.subr.bf16.mxu0 0
    %355 = vmatpush1.bf16.xpose.msra.mxu0 0
    %356 = vmatprep.subr.bf16.mxu0 0
    %357 = vmatpush1.bf16.xpose.msra.mxu0 0
    %358 = vmatprep.subr.bf16.mxu0 0
    %359 = vmatpush1.bf16.xpose.msra.mxu0 0
    %360 = vmatprep.subr.bf16.mxu0 0
    %361 = vmatpush1.bf16.xpose.msra.mxu0 0
    %362 = vmatprep.subr.bf16.mxu0 0
    %363 = vmatpush1.bf16.xpose.msra.mxu0 0
    %364 = vmatprep.subr.bf16.mxu0 0
    %365 = vmatpush1.bf16.xpose.msra.mxu0 0
    %366 = vmatprep.subr.bf16.mxu0 0
    %367 = vmatpush1.bf16.xpose.msra.mxu0 0
    %368 = vmatprep.subr.bf16.mxu0 0
    %369 = vmatpush1.bf16.xpose.msra.mxu0 0
    %370 = vmatprep.subr.bf16.mxu0 0
    %371 = vmatpush1.bf16.xpose.msra.mxu0 0
    %372 = vmatprep.subr.bf16.mxu0 0
    %373 = vmatpush1.bf16.xpose.msra.mxu0 0
    %374 = vmatprep.subr.bf16.mxu0 0
    %375 = vmatpush1.bf16.xpose.msra.mxu0 0
    %376 = vmatprep.mubr.bf16.mxu0 0
    %377 = vmatmul.mubr.bf16.gmra.mrb[0].mxu0 %v339
    %v378 = vpop.f32.mrb[0].mxu0
    %v379 = vadd.f32 0.0, %v378
    %v380 = vpop.f32.mrb[0].mxu0
    %v381 = vpop.f32.mrb[0].mxu0
    %v382 = vpop.f32.mrb[0].mxu0
    %383 = vdwg.mxu0
    %v385 = vsel %vm337, %v330, 0
    %v388 = vsel %vm337, %v334, 0
    %390 = vmatprep.subr.bf16.mxu0 0
    %391 = vmatpush1.bf16.xpose.msra.mxu0 %v388
    %392 = vmatprep.subr.bf16.mxu0 0
    %393 = vmatpush1.bf16.xpose.msra.mxu0 0
    %394 = vmatprep.subr.bf16.mxu0 0
    %395 = vmatpush1.bf16.xpose.msra.mxu0 0
    %396 = vmatprep.subr.bf16.mxu0 0
    %397 = vmatpush1.bf16.xpose.msra.mxu0 0
    %398 = vmatprep.subr.bf16.mxu0 0
    %399 = vmatpush1.bf16.xpose.msra.mxu0 0
    %400 = vmatprep.subr.bf16.mxu0 0
    %401 = vmatpush1.bf16.xpose.msra.mxu0 0
    %402 = vmatprep.subr.bf16.mxu0 0
    %403 = vmatpush1.bf16.xpose.msra.mxu0 0
    %404 = vmatprep.subr.bf16.mxu0 0
    %405 = vmatpush1.bf16.xpose.msra.mxu0 0
    %406 = vmatprep.subr.bf16.mxu0 0
    %407 = vmatpush1.bf16.xpose.msra.mxu0 0
    %408 = vmatprep.subr.bf16.mxu0 0
    %409 = vmatpush1.bf16.xpose.msra.mxu0 0
    %410 = vmatprep.subr.bf16.mxu0 0
    %411 = vmatpush1.bf16.xpose.msra.mxu0 0
    %412 = vmatprep.subr.bf16.mxu0 0
    %413 = vmatpush1.bf16.xpose.msra.mxu0 0
    %414 = vmatprep.subr.bf16.mxu0 0
    %415 = vmatpush1.bf16.xpose.msra.mxu0 0
    %416 = vmatprep.subr.bf16.mxu0 0
    %417 = vmatpush1.bf16.xpose.msra.mxu0 0
    %418 = vmatprep.subr.bf16.mxu0 0
    %419 = vmatpush1.bf16.xpose.msra.mxu0 0
    %420 = vmatprep.subr.bf16.mxu0 0
    %421 = vmatpush1.bf16.xpose.msra.mxu0 0
    %422 = vmatprep.mubr.bf16.mxu0 0
    %423 = vmatmul.mubr.bf16.gmra.mrb[0].mxu0 %v385
    %v424 = vpop.f32.mrb[0].mxu0
    %v425 = vadd.f32 0.0, %v424
    %v426 = vpop.f32.mrb[0].mxu0
    %v427 = vpop.f32.mrb[0].mxu0
    %v428 = vpop.f32.mrb[0].mxu0
    %429 = vdwg.mxu0
    %v431 = vsel %vm337, %v331, 0
    %v434 = vsel %vm337, %v335, 0
    %436 = vmatprep.subr.bf16.mxu0 0
    %437 = vmatpush1.bf16.xpose.msra.mxu0 %v434
    %438 = vmatprep.subr.bf16.mxu0 0
    %439 = vmatpush1.bf16.xpose.msra.mxu0 0
    %440 = vmatprep.subr.bf16.mxu0 0
    %441 = vmatpush1.bf16.xpose.msra.mxu0 0
    %442 = vmatprep.subr.bf16.mxu0 0
    %443 = vmatpush1.bf16.xpose.msra.mxu0 0
    %444 = vmatprep.subr.bf16.mxu0 0
    %445 = vmatpush1.bf16.xpose.msra.mxu0 0
    %446 = vmatprep.subr.bf16.mxu0 0
    %447 = vmatpush1.bf16.xpose.msra.mxu0 0
    %448 = vmatprep.subr.bf16.mxu0 0
    %449 = vmatpush1.bf16.xpose.msra.mxu0 0
    %450 = vmatprep.subr.bf16.mxu0 0
    %451 = vmatpush1.bf16.xpose.msra.mxu0 0
    %452 = vmatprep.subr.bf16.mxu0 0
    %453 = vmatpush1.bf16.xpose.msra.mxu0 0
    %454 = vmatprep.subr.bf16.mxu0 0
    %455 = vmatpush1.bf16.xpose.msra.mxu0 0
    %456 = vmatprep.subr.bf16.mxu0 0
    %457 = vmatpush1.bf16.xpose.msra.mxu0 0
    %458 = vmatprep.subr.bf16.mxu0 0
    %459 = vmatpush1.bf16.xpose.msra.mxu0 0
    %460 = vmatprep.subr.bf16.mxu0 0
    %461 = vmatpush1.bf16.xpose.msra.mxu0 0
    %462 = vmatprep.subr.bf16.mxu0 0
    %463 = vmatpush1.bf16.xpose.msra.mxu0 0
    %464 = vmatprep.subr.bf16.mxu0 0
    %465 = vmatpush1.bf16.xpose.msra.mxu0 0
    %466 = vmatprep.subr.bf16.mxu0 0
    %467 = vmatpush1.bf16.xpose.msra.mxu0 0
    %468 = vmatprep.mubr.bf16.mxu0 0
    %469 = vmatmul.mubr.bf16.gmra.mrb[0].mxu0 %v431
    %v470 = vpop.f32.mrb[0].mxu0
    %v471 = vadd.f32 0.0, %v470
    %v472 = vpop.f32.mrb[0].mxu0
    %v473 = vpop.f32.mrb[0].mxu0
    %v474 = vpop.f32.mrb[0].mxu0
    %475 = vdwg.mxu0
    %v477 = vsel %vm337, %v332, 0
    %v480 = vsel %vm337, %v336, 0
    %482 = vmatprep.subr.bf16.mxu0 0
    %483 = vmatpush1.bf16.xpose.msra.mxu0 %v480
    %484 = vmatprep.subr.bf16.mxu0 0
    %485 = vmatpush1.bf16.xpose.msra.mxu0 0
    %486 = vmatprep.subr.bf16.mxu0 0
    %487 = vmatpush1.bf16.xpose.msra.mxu0 0
    %488 = vmatprep.subr.bf16.mxu0 0
    %489 = vmatpush1.bf16.xpose.msra.mxu0 0
    %490 = vmatprep.subr.bf16.mxu0 0
    %491 = vmatpush1.bf16.xpose.msra.mxu0 0
    %492 = vmatprep.subr.bf16.mxu0 0
    %493 = vmatpush1.bf16.xpose.msra.mxu0 0
    %494 = vmatprep.subr.bf16.mxu0 0
    %495 = vmatpush1.bf16.xpose.msra.mxu0 0
    %496 = vmatprep.subr.bf16.mxu0 0
    %497 = vmatpush1.bf16.xpose.msra.mxu0 0
    %498 = vmatprep.subr.bf16.mxu0 0
    %499 = vmatpush1.bf16.xpose.msra.mxu0 0
    %500 = vmatprep.subr.bf16.mxu0 0
    %501 = vmatpush1.bf16.xpose.msra.mxu0 0
    %502 = vmatprep.subr.bf16.mxu0 0
    %503 = vmatpush1.bf16.xpose.msra.mxu0 0
    %504 = vmatprep.subr.bf16.mxu0 0
    %505 = vmatpush1.bf16.xpose.msra.mxu0 0
    %506 = vmatprep.subr.bf16.mxu0 0
    %507 = vmatpush1.bf16.xpose.msra.mxu0 0
    %508 = vmatprep.subr.bf16.mxu0 0
    %509 = vmatpush1.bf16.xpose.msra.mxu0 0
    %510 = vmatprep.subr.bf16.mxu0 0
    %511 = vmatpush1.bf16.xpose.msra.mxu0 0
    %512 = vmatprep.subr.bf16.mxu0 0
    %513 = vmatpush1.bf16.xpose.msra.mxu0 0
    %514 = vmatprep.mubr.bf16.mxu0 0
    %515 = vmatmul.mubr.bf16.gmra.mrb[0].mxu0 %v477
    %v516 = vpop.f32.mrb[0].mxu0
    %v517 = vadd.f32 0.0, %v516
    %v518 = vpop.f32.mrb[0].mxu0
    %v519 = vpop.f32.mrb[0].mxu0
    %v520 = vpop.f32.mrb[0].mxu0
    %521 = vdwg.mxu0
    %s522 = sld [smem:[#allocation2]]
    %v523 = vlaneseq
    %v524 = vand.u32 %v523, 127
    %v525 = vstv %s522
    %vm526 = vcmp.lt.s32.totalorder %v524, %v525
    %v527 = vsel %vm526, %v379, -1000000.0
    %v528 = vsel %vm526, %v425, -1000000.0
    %v529 = vsel %vm526, %v471, -1000000.0
    %v530 = vsel %vm526, %v517, -1000000.0
    %v531 = vsel %vm337, %v527, -inf
    %532 = vmax.xlane.f32.xlu0 %v531
    %v533 = vpop.xlane.xlu0 %532
    %v534 = vsel %vm337, %v528, -inf
    %535 = vmax.xlane.f32.xlu0 %v534
    %v536 = vpop.xlane.xlu0 %535
    %v537 = vsel %vm337, %v529, -inf
    %538 = vmax.xlane.f32.xlu0 %v537
    %v539 = vpop.xlane.xlu0 %538
    %v540 = vsel %vm337, %v530, -inf
    %541 = vmax.xlane.f32.xlu0 %v540
    %v542 = vpop.xlane.xlu0 %541
    %v543 = vsub.f32 %v527, %v533
    %v544 = vsub.f32 %v528, %v536
    %v545 = vsub.f32 %v529, %v539
    %v546 = vsub.f32 %v530, %v542
    %v547 = vmul.f32 %v543, 1.442695
    %v548 = vpow.pop %v547
    %v549 = vmul.f32 %v544, 1.442695
    %v550 = vpow.pop %v549
    %v551 = vmul.f32 %v545, 1.442695
    %v552 = vpow.pop %v551
    %v553 = vmul.f32 %v546, 1.442695
    %v554 = vpow.pop %v553
    %v555 = vsel %vm337, %v548, 0.0
    %556 = vadd.xlane.f32.xlu0 %v555
    %v557 = vpop.xlane.xlu0 %556
    %v558 = vsel %vm337, %v550, 0.0
    %559 = vadd.xlane.f32.xlu0 %v558
    %v560 = vpop.xlane.xlu0 %559
    %v561 = vsel %vm337, %v552, 0.0
    %562 = vadd.xlane.f32.xlu0 %v561
    %v563 = vpop.xlane.xlu0 %562
    %v564 = vsel %vm337, %v554, 0.0
    %565 = vadd.xlane.f32.xlu0 %v564
    %v566 = vpop.xlane.xlu0 %565
    %v567 = vrcp.pop %v557
    %v568 = vrcp.pop %v560
    %v569 = vrcp.pop %v563
    %v570 = vrcp.pop %v566
    %v571 = vmul.f32 %v548, %v567
    %v572 = vmul.f32 %v550, %v568
    %v573 = vmul.f32 %v552, %v569
    %v574 = vmul.f32 %v554, %v570
    %v575 = vpack.c.bf16 %v571, %v571
    %v576 = vpack.c.bf16 %v572, %v572
    %v577 = vpack.c.bf16 %v573, %v573
    %v578 = vpack.c.bf16 %v574, %v574
    %v579 = vpack.c.bf16 %v291, %v291
    %v580 = vpack.c.bf16 %v321, %v321
    %v581 = vpack.c.bf16 %v324, %v324
    %v582 = vpack.c.bf16 %v327, %v327
    %v584 = vsel %vm337, %v575, 0
    %vm586 = vcmask 1043456
    %v588 = vsel %vm586, %v579, 0
    %590 = vmatprep.subr.bf16.mxu0 0
    %591 = vmatpush1.bf16.msra.mxu0 %v588
    %592 = vmatprep.subr.bf16.mxu0 0
    %593 = vmatpush1.bf16.msra.mxu0 0
    %594 = vmatprep.subr.bf16.mxu0 0
    %595 = vmatpush1.bf16.msra.mxu0 0
    %596 = vmatprep.subr.bf16.mxu0 0
    %597 = vmatpush1.bf16.msra.mxu0 0
    %598 = vmatprep.subr.bf16.mxu0 0
    %599 = vmatpush1.bf16.msra.mxu0 0
    %600 = vmatprep.subr.bf16.mxu0 0
    %601 = vmatpush1.bf16.msra.mxu0 0
    %602 = vmatprep.subr.bf16.mxu0 0
    %603 = vmatpush1.bf16.msra.mxu0 0
    %604 = vmatprep.subr.bf16.mxu0 0
    %605 = vmatpush1.bf16.msra.mxu0 0
    %606 = vmatprep.subr.bf16.mxu0 0
    %607 = vmatpush1.bf16.msra.mxu0 0
    %608 = vmatprep.subr.bf16.mxu0 0
    %609 = vmatpush1.bf16.msra.mxu0 0
    %610 = vmatprep.subr.bf16.mxu0 0
    %611 = vmatpush1.bf16.msra.mxu0 0
    %612 = vmatprep.subr.bf16.mxu0 0
    %613 = vmatpush1.bf16.msra.mxu0 0
    %614 = vmatprep.subr.bf16.mxu0 0
    %615 = vmatpush1.bf16.msra.mxu0 0
    %616 = vmatprep.subr.bf16.mxu0 0
    %617 = vmatpush1.bf16.msra.mxu0 0
    %618 = vmatprep.subr.bf16.mxu0 0
    %619 = vmatpush1.bf16.msra.mxu0 0
    %620 = vmatprep.subr.bf16.mxu0 0
    %621 = vmatpush1.bf16.msra.mxu0 0
    %622 = vmatprep.mubr.bf16.mxu0 0
    %623 = vmatmul.mubr.bf16.gmra.mrb[0].mxu0 %v584
    %v624 = vpop.f32.mrb[0].mxu0
    %v625 = vadd.f32 0.0, %v624
    %v626 = vpop.f32.mrb[0].mxu0
    %v627 = vpop.f32.mrb[0].mxu0
    %v628 = vpop.f32.mrb[0].mxu0
    %629 = vdwg.mxu0
    %v631 = vsel %vm337, %v576, 0
    %v634 = vsel %vm586, %v580, 0
    %636 = vmatprep.subr.bf16.mxu0 0
    %637 = vmatpush1.bf16.msra.mxu0 %v634
    %638 = vmatprep.subr.bf16.mxu0 0
    %639 = vmatpush1.bf16.msra.mxu0 0
    %640 = vmatprep.subr.bf16.mxu0 0
    %641 = vmatpush1.bf16.msra.mxu0 0
    %642 = vmatprep.subr.bf16.mxu0 0
    %643 = vmatpush1.bf16.msra.mxu0 0
    %644 = vmatprep.subr.bf16.mxu0 0
    %645 = vmatpush1.bf16.msra.mxu0 0
    %646 = vmatprep.subr.bf16.mxu0 0
    %647 = vmatpush1.bf16.msra.mxu0 0
    %648 = vmatprep.subr.bf16.mxu0 0
    %649 = vmatpush1.bf16.msra.mxu0 0
    %650 = vmatprep.subr.bf16.mxu0 0
    %651 = vmatpush1.bf16.msra.mxu0 0
    %652 = vmatprep.subr.bf16.mxu0 0
    %653 = vmatpush1.bf16.msra.mxu0 0
    %654 = vmatprep.subr.bf16.mxu0 0
    %655 = vmatpush1.bf16.msra.mxu0 0
    %656 = vmatprep.subr.bf16.mxu0 0
    %657 = vmatpush1.bf16.msra.mxu0 0
    %658 = vmatprep.subr.bf16.mxu0 0
    %659 = vmatpush1.bf16.msra.mxu0 0
    %660 = vmatprep.subr.bf16.mxu0 0
    %661 = vmatpush1.bf16.msra.mxu0 0
    %662 = vmatprep.subr.bf16.mxu0 0
    %663 = vmatpush1.bf16.msra.mxu0 0
    %664 = vmatprep.subr.bf16.mxu0 0
    %665 = vmatpush1.bf16.msra.mxu0 0
    %666 = vmatprep.subr.bf16.mxu0 0
    %667 = vmatpush1.bf16.msra.mxu0 0
    %668 = vmatprep.mubr.bf16.mxu0 0
    %669 = vmatmul.mubr.bf16.gmra.mrb[0].mxu0 %v631
    %v670 = vpop.f32.mrb[0].mxu0
    %v671 = vadd.f32 0.0, %v670
    %v672 = vpop.f32.mrb[0].mxu0
    %v673 = vpop.f32.mrb[0].mxu0
    %v674 = vpop.f32.mrb[0].mxu0
    %675 = vdwg.mxu0
    %v677 = vsel %vm337, %v577, 0
    %v680 = vsel %vm586, %v581, 0
    %682 = vmatprep.subr.bf16.mxu0 0
    %683 = vmatpush1.bf16.msra.mxu0 %v680
    %684 = vmatprep.subr.bf16.mxu0 0
    %685 = vmatpush1.bf16.msra.mxu0 0
    %686 = vmatprep.subr.bf16.mxu0 0
    %687 = vmatpush1.bf16.msra.mxu0 0
    %688 = vmatprep.subr.bf16.mxu0 0
    %689 = vmatpush1.bf16.msra.mxu0 0
    %690 = vmatprep.subr.bf16.mxu0 0
    %691 = vmatpush1.bf16.msra.mxu0 0
    %692 = vmatprep.subr.bf16.mxu0 0
    %693 = vmatpush1.bf16.msra.mxu0 0
    %694 = vmatprep.subr.bf16.mxu0 0
    %695 = vmatpush1.bf16.msra.mxu0 0
    %696 = vmatprep.subr.bf16.mxu0 0
    %697 = vmatpush1.bf16.msra.mxu0 0
    %698 = vmatprep.subr.bf16.mxu0 0
    %699 = vmatpush1.bf16.msra.mxu0 0
    %700 = vmatprep.subr.bf16.mxu0 0
    %701 = vmatpush1.bf16.msra.mxu0 0
    %702 = vmatprep.subr.bf16.mxu0 0
    %703 = vmatpush1.bf16.msra.mxu0 0
    %704 = vmatprep.subr.bf16.mxu0 0
    %705 = vmatpush1.bf16.msra.mxu0 0
    %706 = vmatprep.subr.bf16.mxu0 0
    %707 = vmatpush1.bf16.msra.mxu0 0
    %708 = vmatprep.subr.bf16.mxu0 0
    %709 = vmatpush1.bf16.msra.mxu0 0
    %710 = vmatprep.subr.bf16.mxu0 0
    %711 = vmatpush1.bf16.msra.mxu0 0
    %712 = vmatprep.subr.bf16.mxu0 0
    %713 = vmatpush1.bf16.msra.mxu0 0
    %714 = vmatprep.mubr.bf16.mxu0 0
    %715 = vmatmul.mubr.bf16.gmra.mrb[0].mxu0 %v677
    %v716 = vpop.f32.mrb[0].mxu0
    %v717 = vadd.f32 0.0, %v716
    %v718 = vpop.f32.mrb[0].mxu0
    %v719 = vpop.f32.mrb[0].mxu0
    %v720 = vpop.f32.mrb[0].mxu0
    %721 = vdwg.mxu0
    %v723 = vsel %vm337, %v578, 0
    %v726 = vsel %vm586, %v582, 0
    %728 = vmatprep.subr.bf16.mxu0 0
    %729 = vmatpush1.bf16.msra.mxu0 %v726
    %730 = vmatprep.subr.bf16.mxu0 0
    %731 = vmatpush1.bf16.msra.mxu0 0
    %732 = vmatprep.subr.bf16.mxu0 0
    %733 = vmatpush1.bf16.msra.mxu0 0
    %734 = vmatprep.subr.bf16.mxu0 0
    %735 = vmatpush1.bf16.msra.mxu0 0
    %736 = vmatprep.subr.bf16.mxu0 0
    %737 = vmatpush1.bf16.msra.mxu0 0
    %738 = vmatprep.subr.bf16.mxu0 0
    %739 = vmatpush1.bf16.msra.mxu0 0
    %740 = vmatprep.subr.bf16.mxu0 0
    %741 = vmatpush1.bf16.msra.mxu0 0
    %742 = vmatprep.subr.bf16.mxu0 0
    %743 = vmatpush1.bf16.msra.mxu0 0
    %744 = vmatprep.subr.bf16.mxu0 0
    %745 = vmatpush1.bf16.msra.mxu0 0
    %746 = vmatprep.subr.bf16.mxu0 0
    %747 = vmatpush1.bf16.msra.mxu0 0
    %748 = vmatprep.subr.bf16.mxu0 0
    %749 = vmatpush1.bf16.msra.mxu0 0
    %750 = vmatprep.subr.bf16.mxu0 0
    %751 = vmatpush1.bf16.msra.mxu0 0
    %752 = vmatprep.subr.bf16.mxu0 0
    %753 = vmatpush1.bf16.msra.mxu0 0
    %754 = vmatprep.subr.bf16.mxu0 0
    %755 = vmatpush1.bf16.msra.mxu0 0
    %756 = vmatprep.subr.bf16.mxu0 0
    %757 = vmatpush1.bf16.msra.mxu0 0
    %758 = vmatprep.subr.bf16.mxu0 0
    %759 = vmatpush1.bf16.msra.mxu0 0
    %760 = vmatprep.mubr.bf16.mxu0 0
    %761 = vmatmul.mubr.bf16.gmra.mrb[0].mxu0 %v723
    %v762 = vpop.f32.mrb[0].mxu0
    %v763 = vadd.f32 0.0, %v762
    %v764 = vpop.f32.mrb[0].mxu0
    %v765 = vpop.f32.mrb[0].mxu0
    %v766 = vpop.f32.mrb[0].mxu0
    %767 = vdwg.mxu0
    %769 = vrot.lane.b32.xlu0 %v671, 8
    %v770 = vpop.permute.xlu0 %769
    %773 = vrot.lane.b32.xlu0 %v717, 16
    %v774 = vpop.permute.xlu0 %773
    %777 = vrot.lane.b32.xlu0 %v763, 24
    %v778 = vpop.permute.xlu0 %777
    %v780 = vsel %vm337, %v625, %v770
    %vm781 = vcmask 130048
    %v782 = vsel %vm781, %v780, %v774
    %vm783 = vcmask 195584
    %v784 = vsel %vm783, %v782, %v778
    %786 = vrot.lane.b32.xlu0 %v298, 120
    %v787 = vpop.permute.xlu0 %786
    %789 = vrot.lane.b32.xlu0 %v298, 112
    %v790 = vpop.permute.xlu0 %789
    %792 = vrot.lane.b32.xlu0 %v298, 104
    %v793 = vpop.permute.xlu0 %792
    %796 = vrot.lane.b32.xlu0 %v241, 120
    %v797 = vpop.permute.xlu0 %796
    %799 = vrot.lane.b32.xlu0 %v241, 112
    %v800 = vpop.permute.xlu0 %799
    %802 = vrot.lane.b32.xlu0 %v241, 104
    %v803 = vpop.permute.xlu0 %802
    %806 = vrot.lane.b32.xlu0 %v294, 120
    %v807 = vpop.permute.xlu0 %806
    %809 = vrot.lane.b32.xlu0 %v294, 112
    %v810 = vpop.permute.xlu0 %809
    %812 = vrot.lane.b32.xlu0 %v294, 104
    %v813 = vpop.permute.xlu0 %812
    %v815 = vpack.c.bf16 %v298, %v298
    %v816 = vpack.c.bf16 %v787, %v787
    %v817 = vpack.c.bf16 %v790, %v790
    %v818 = vpack.c.bf16 %v793, %v793
    %v819 = vpack.c.bf16 %v241, %v241
    %v820 = vpack.c.bf16 %v797, %v797
    %v821 = vpack.c.bf16 %v800, %v800
    %v822 = vpack.c.bf16 %v803, %v803
    %v824 = vsel %vm337, %v815, 0
    %v827 = vsel %vm337, %v819, 0
    %829 = vmatprep.subr.bf16.mxu0 0
    %830 = vmatpush1.bf16.xpose.msra.mxu0 %v827
    %831 = vmatprep.subr.bf16.mxu0 0
    %832 = vmatpush1.bf16.xpose.msra.mxu0 0
    %833 = vmatprep.subr.bf16.mxu0 0
    %834 = vmatpush1.bf16.xpose.msra.mxu0 0
    %835 = vmatprep.subr.bf16.mxu0 0
    %836 = vmatpush1.bf16.xpose.msra.mxu0 0
    %837 = vmatprep.subr.bf16.mxu0 0
    %838 = vmatpush1.bf16.xpose.msra.mxu0 0
    %839 = vmatprep.subr.bf16.mxu0 0
    %840 = vmatpush1.bf16.xpose.msra.mxu0 0
    %841 = vmatprep.subr.bf16.mxu0 0
    %842 = vmatpush1.bf16.xpose.msra.mxu0 0
    %843 = vmatprep.subr.bf16.mxu0 0
    %844 = vmatpush1.bf16.xpose.msra.mxu0 0
    %845 = vmatprep.subr.bf16.mxu0 0
    %846 = vmatpush1.bf16.xpose.msra.mxu0 0
    %847 = vmatprep.subr.bf16.mxu0 0
    %848 = vmatpush1.bf16.xpose.msra.mxu0 0
    %849 = vmatprep.subr.bf16.mxu0 0
    %850 = vmatpush1.bf16.xpose.msra.mxu0 0
    %851 = vmatprep.subr.bf16.mxu0 0
    %852 = vmatpush1.bf16.xpose.msra.mxu0 0
    %853 = vmatprep.subr.bf16.mxu0 0
    %854 = vmatpush1.bf16.xpose.msra.mxu0 0
    %855 = vmatprep.subr.bf16.mxu0 0
    %856 = vmatpush1.bf16.xpose.msra.mxu0 0
    %857 = vmatprep.subr.bf16.mxu0 0
    %858 = vmatpush1.bf16.xpose.msra.mxu0 0
    %859 = vmatprep.subr.bf16.mxu0 0
    %860 = vmatpush1.bf16.xpose.msra.mxu0 0
    %861 = vmatprep.mubr.bf16.mxu0 0
    %862 = vmatmul.mubr.bf16.gmra.mrb[0].mxu0 %v824
    %v863 = vpop.f32.mrb[0].mxu0
    %v864 = vadd.f32 0.0, %v863
    %v865 = vpop.f32.mrb[0].mxu0
    %v866 = vpop.f32.mrb[0].mxu0
    %v867 = vpop.f32.mrb[0].mxu0
    %868 = vdwg.mxu0
    %v870 = vsel %vm337, %v816, 0
    %v873 = vsel %vm337, %v820, 0
    %875 = vmatprep.subr.bf16.mxu0 0
    %876 = vmatpush1.bf16.xpose.msra.mxu0 %v873
    %877 = vmatprep.subr.bf16.mxu0 0
    %878 = vmatpush1.bf16.xpose.msra.mxu0 0
    %879 = vmatprep.subr.bf16.mxu0 0
    %880 = vmatpush1.bf16.xpose.msra.mxu0 0
    %881 = vmatprep.subr.bf16.mxu0 0
    %882 = vmatpush1.bf16.xpose.msra.mxu0 0
    %883 = vmatprep.subr.bf16.mxu0 0
    %884 = vmatpush1.bf16.xpose.msra.mxu0 0
    %885 = vmatprep.subr.bf16.mxu0 0
    %886 = vmatpush1.bf16.xpose.msra.mxu0 0
    %887 = vmatprep.subr.bf16.mxu0 0
    %888 = vmatpush1.bf16.xpose.msra.mxu0 0
    %889 = vmatprep.subr.bf16.mxu0 0
    %890 = vmatpush1.bf16.xpose.msra.mxu0 0
    %891 = vmatprep.subr.bf16.mxu0 0
    %892 = vmatpush1.bf16.xpose.msra.mxu0 0
    %893 = vmatprep.subr.bf16.mxu0 0
    %894 = vmatpush1.bf16.xpose.msra.mxu0 0
    %895 = vmatprep.subr.bf16.mxu0 0
    %896 = vmatpush1.bf16.xpose.msra.mxu0 0
    %897 = vmatprep.subr.bf16.mxu0 0
    %898 = vmatpush1.bf16.xpose.msra.mxu0 0
    %899 = vmatprep.subr.bf16.mxu0 0
    %900 = vmatpush1.bf16.xpose.msra.mxu0 0
    %901 = vmatprep.subr.bf16.mxu0 0
    %902 = vmatpush1.bf16.xpose.msra.mxu0 0
    %903 = vmatprep.subr.bf16.mxu0 0
    %904 = vmatpush1.bf16.xpose.msra.mxu0 0
    %905 = vmatprep.subr.bf16.mxu0 0
    %906 = vmatpush1.bf16.xpose.msra.mxu0 0
    %907 = vmatprep.mubr.bf16.mxu0 0
    %908 = vmatmul.mubr.bf16.gmra.mrb[0].mxu0 %v870
    %v909 = vpop.f32.mrb[0].mxu0
    %v910 = vadd.f32 0.0, %v909
    %v911 = vpop.f32.mrb[0].mxu0
    %v912 = vpop.f32.mrb[0].mxu0
    %v913 = vpop.f32.mrb[0].mxu0
    %914 = vdwg.mxu0
    %v916 = vsel %vm337, %v817, 0
    %v919 = vsel %vm337, %v821, 0
    %921 = vmatprep.subr.bf16.mxu0 0
    %922 = vmatpush1.bf16.xpose.msra.mxu0 %v919
    %923 = vmatprep.subr.bf16.mxu0 0
    %924 = vmatpush1.bf16.xpose.msra.mxu0 0
    %925 = vmatprep.subr.bf16.mxu0 0
    %926 = vmatpush1.bf16.xpose.msra.mxu0 0
    %927 = vmatprep.subr.bf16.mxu0 0
    %928 = vmatpush1.bf16.xpose.msra.mxu0 0
    %929 = vmatprep.subr.bf16.mxu0 0
    %930 = vmatpush1.bf16.xpose.msra.mxu0 0
    %931 = vmatprep.subr.bf16.mxu0 0
    %932 = vmatpush1.bf16.xpose.msra.mxu0 0
    %933 = vmatprep.subr.bf16.mxu0 0
    %934 = vmatpush1.bf16.xpose.msra.mxu0 0
    %935 = vmatprep.subr.bf16.mxu0 0
    %936 = vmatpush1.bf16.xpose.msra.mxu0 0
    %937 = vmatprep.subr.bf16.mxu0 0
    %938 = vmatpush1.bf16.xpose.msra.mxu0 0
    %939 = vmatprep.subr.bf16.mxu0 0
    %940 = vmatpush1.bf16.xpose.msra.mxu0 0
    %941 = vmatprep.subr.bf16.mxu0 0
    %942 = vmatpush1.bf16.xpose.msra.mxu0 0
    %943 = vmatprep.subr.bf16.mxu0 0
    %944 = vmatpush1.bf16.xpose.msra.mxu0 0
    %945 = vmatprep.subr.bf16.mxu0 0
    %946 = vmatpush1.bf16.xpose.msra.mxu0 0
    %947 = vmatprep.subr.bf16.mxu0 0
    %948 = vmatpush1.bf16.xpose.msra.mxu0 0
    %949 = vmatprep.subr.bf16.mxu0 0
    %950 = vmatpush1.bf16.xpose.msra.mxu0 0
    %951 = vmatprep.subr.bf16.mxu0 0
    %952 = vmatpush1.bf16.xpose.msra.mxu0 0
    %953 = vmatprep.mubr.bf16.mxu0 0
    %954 = vmatmul.mubr.bf16.gmra.mrb[0].mxu0 %v916
    %v955 = vpop.f32.mrb[0].mxu0
    %v956 = vadd.f32 0.0, %v955
    %v957 = vpop.f32.mrb[0].mxu0
    %v958 = vpop.f32.mrb[0].mxu0
    %v959 = vpop.f32.mrb[0].mxu0
    %960 = vdwg.mxu0
    %v962 = vsel %vm337, %v818, 0
    %v965 = vsel %vm337, %v822, 0
    %967 = vmatprep.subr.bf16.mxu0 0
    %968 = vmatpush1.bf16.xpose.msra.mxu0 %v965
    %969 = vmatprep.subr.bf16.mxu0 0
    %970 = vmatpush1.bf16.xpose.msra.mxu0 0
    %971 = vmatprep.subr.bf16.mxu0 0
    %972 = vmatpush1.bf16.xpose.msra.mxu0 0
    %973 = vmatprep.subr.bf16.mxu0 0
    %974 = vmatpush1.bf16.xpose.msra.mxu0 0
    %975 = vmatprep.subr.bf16.mxu0 0
    %976 = vmatpush1.bf16.xpose.msra.mxu0 0
    %977 = vmatprep.subr.bf16.mxu0 0
    %978 = vmatpush1.bf16.xpose.msra.mxu0 0
    %979 = vmatprep.subr.bf16.mxu0 0
    %980 = vmatpush1.bf16.xpose.msra.mxu0 0
    %981 = vmatprep.subr.bf16.mxu0 0
    %982 = vmatpush1.bf16.xpose.msra.mxu0 0
    %983 = vmatprep.subr.bf16.mxu0 0
    %984 = vmatpush1.bf16.xpose.msra.mxu0 0
    %985 = vmatprep.subr.bf16.mxu0 0
    %986 = vmatpush1.bf16.xpose.msra.mxu0 0
    %987 = vmatprep.subr.bf16.mxu0 0
    %988 = vmatpush1.bf16.xpose.msra.mxu0 0
    %989 = vmatprep.subr.bf16.mxu0 0
    %990 = vmatpush1.bf16.xpose.msra.mxu0 0
    %991 = vmatprep.subr.bf16.mxu0 0
    %992 = vmatpush1.bf16.xpose.msra.mxu0 0
    %993 = vmatprep.subr.bf16.mxu0 0
    %994 = vmatpush1.bf16.xpose.msra.mxu0 0
    %995 = vmatprep.subr.bf16.mxu0 0
    %996 = vmatpush1.bf16.xpose.msra.mxu0 0
    %997 = vmatprep.subr.bf16.mxu0 0
    %998 = vmatpush1.bf16.xpose.msra.mxu0 0
    %999 = vmatprep.mubr.bf16.mxu0 0
    %1000 = vmatmul.mubr.bf16.gmra.mrb[0].mxu0 %v962
    %v1001 = vpop.f32.mrb[0].mxu0
    %v1002 = vadd.f32 0.0, %v1001
    %v1003 = vpop.f32.mrb[0].mxu0
    %v1004 = vpop.f32.mrb[0].mxu0
    %v1005 = vpop.f32.mrb[0].mxu0
    %1006 = vdwg.mxu0
    %s1007 = sld [smem:[#allocation2 + $0x1]]
    %v1008 = vstv %s1007
    %vm1009 = vcmp.lt.s32.totalorder %v524, %v1008
    %v1010 = vsel %vm1009, %v864, -1000000.0
    %v1011 = vsel %vm1009, %v910, -1000000.0
    %v1012 = vsel %vm1009, %v956, -1000000.0
    %v1013 = vsel %vm1009, %v1002, -1000000.0
    %v1014 = vsel %vm337, %v1010, -inf
    %1015 = vmax.xlane.f32.xlu0 %v1014
    %v1016 = vpop.xlane.xlu0 %1015
    %v1017 = vsel %vm337, %v1011, -inf
    %1018 = vmax.xlane.f32.xlu0 %v1017
    %v1019 = vpop.xlane.xlu0 %1018
    %v1020 = vsel %vm337, %v1012, -inf
    %1021 = vmax.xlane.f32.xlu0 %v1020
    %v1022 = vpop.xlane.xlu0 %1021
    %v1023 = vsel %vm337, %v1013, -inf
    %1024 = vmax.xlane.f32.xlu0 %v1023
    %v1025 = vpop.xlane.xlu0 %1024
    %v1026 = vsub.f32 %v1010, %v1016
    %v1027 = vsub.f32 %v1011, %v1019
    %v1028 = vsub.f32 %v1012, %v1022
    %v1029 = vsub.f32 %v1013, %v1025
    %v1030 = vmul.f32 %v1026, 1.442695
    %v1031 = vpow.pop %v1030
    %v1032 = vmul.f32 %v1027, 1.442695
    %v1033 = vpow.pop %v1032
    %v1034 = vmul.f32 %v1028, 1.442695
    %v1035 = vpow.pop %v1034
    %v1036 = vmul.f32 %v1029, 1.442695
    %v1037 = vpow.pop %v1036
    %v1038 = vsel %vm337, %v1031, 0.0
    %1039 = vadd.xlane.f32.xlu0 %v1038
    %v1040 = vpop.xlane.xlu0 %1039
    %v1041 = vsel %vm337, %v1033, 0.0
    %1042 = vadd.xlane.f32.xlu0 %v1041
    %v1043 = vpop.xlane.xlu0 %1042
    %v1044 = vsel %vm337, %v1035, 0.0
    %1045 = vadd.xlane.f32.xlu0 %v1044
    %v1046 = vpop.xlane.xlu0 %1045
    %v1047 = vsel %vm337, %v1037, 0.0
    %1048 = vadd.xlane.f32.xlu0 %v1047
    %v1049 = vpop.xlane.xlu0 %1048
    %v1050 = vrcp.pop %v1040
    %v1051 = vrcp.pop %v1043
    %v1052 = vrcp.pop %v1046
    %v1053 = vrcp.pop %v1049
    %v1054 = vmul.f32 %v1031, %v1050
    %v1055 = vmul.f32 %v1033, %v1051
    %v1056 = vmul.f32 %v1035, %v1052
    %v1057 = vmul.f32 %v1037, %v1053
    %v1058 = vpack.c.bf16 %v1054, %v1054
    %v1059 = vpack.c.bf16 %v1055, %v1055
    %v1060 = vpack.c.bf16 %v1056, %v1056
    %v1061 = vpack.c.bf16 %v1057, %v1057
    %v1062 = vpack.c.bf16 %v294, %v294
    %v1063 = vpack.c.bf16 %v807, %v807
    %v1064 = vpack.c.bf16 %v810, %v810
    %v1065 = vpack.c.bf16 %v813, %v813
    %v1067 = vsel %vm337, %v1058, 0
    %v1070 = vsel %vm586, %v1062, 0
    %1072 = vmatprep.subr.bf16.mxu0 0
    %1073 = vmatpush1.bf16.msra.mxu0 %v1070
    %1074 = vmatprep.subr.bf16.mxu0 0
    %1075 = vmatpush1.bf16.msra.mxu0 0
    %1076 = vmatprep.subr.bf16.mxu0 0
    %1077 = vmatpush1.bf16.msra.mxu0 0
    %1078 = vmatprep.subr.bf16.mxu0 0
    %1079 = vmatpush1.bf16.msra.mxu0 0
    %1080 = vmatprep.subr.bf16.mxu0 0
    %1081 = vmatpush1.bf16.msra.mxu0 0
    %1082 = vmatprep.subr.bf16.mxu0 0
    %1083 = vmatpush1.bf16.msra.mxu0 0
    %1084 = vmatprep.subr.bf16.mxu0 0
    %1085 = vmatpush1.bf16.msra.mxu0 0
    %1086 = vmatprep.subr.bf16.mxu0 0
    %1087 = vmatpush1.bf16.msra.mxu0 0
    %1088 = vmatprep.subr.bf16.mxu0 0
    %1089 = vmatpush1.bf16.msra.mxu0 0
    %1090 = vmatprep.subr.bf16.mxu0 0
    %1091 = vmatpush1.bf16.msra.mxu0 0
    %1092 = vmatprep.subr.bf16.mxu0 0
    %1093 = vmatpush1.bf16.msra.mxu0 0
    %1094 = vmatprep.subr.bf16.mxu0 0
    %1095 = vmatpush1.bf16.msra.mxu0 0
    %1096 = vmatprep.subr.bf16.mxu0 0
    %1097 = vmatpush1.bf16.msra.mxu0 0
    %1098 = vmatprep.subr.bf16.mxu0 0
    %1099 = vmatpush1.bf16.msra.mxu0 0
    %1100 = vmatprep.subr.bf16.mxu0 0
    %1101 = vmatpush1.bf16.msra.mxu0 0
    %1102 = vmatprep.subr.bf16.mxu0 0
    %1103 = vmatpush1.bf16.msra.mxu0 0
    %1104 = vmatprep.mubr.bf16.mxu0 0
    %1105 = vmatmul.mubr.bf16.gmra.mrb[0].mxu0 %v1067
    %v1106 = vpop.f32.mrb[0].mxu0
    %v1107 = vadd.f32 0.0, %v1106
    %v1108 = vpop.f32.mrb[0].mxu0
    %v1109 = vpop.f32.mrb[0].mxu0
    %v1110 = vpop.f32.mrb[0].mxu0
    %1111 = vdwg.mxu0
    %v1113 = vsel %vm337, %v1059, 0
    %v1116 = vsel %vm586, %v1063, 0
    %1118 = vmatprep.subr.bf16.mxu0 0
    %1119 = vmatpush1.bf16.msra.mxu0 %v1116
    %1120 = vmatprep.subr.bf16.mxu0 0
    %1121 = vmatpush1.bf16.msra.mxu0 0
    %1122 = vmatprep.subr.bf16.mxu0 0
    %1123 = vmatpush1.bf16.msra.mxu0 0
    %1124 = vmatprep.subr.bf16.mxu0 0
    %1125 = vmatpush1.bf16.msra.mxu0 0
    %1126 = vmatprep.subr.bf16.mxu0 0
    %1127 = vmatpush1.bf16.msra.mxu0 0
    %1128 = vmatprep.subr.bf16.mxu0 0
    %1129 = vmatpush1.bf16.msra.mxu0 0
    %1130 = vmatprep.subr.bf16.mxu0 0
    %1131 = vmatpush1.bf16.msra.mxu0 0
    %1132 = vmatprep.subr.bf16.mxu0 0
    %1133 = vmatpush1.bf16.msra.mxu0 0
    %1134 = vmatprep.subr.bf16.mxu0 0
    %1135 = vmatpush1.bf16.msra.mxu0 0
    %1136 = vmatprep.subr.bf16.mxu0 0
    %1137 = vmatpush1.bf16.msra.mxu0 0
    %1138 = vmatprep.subr.bf16.mxu0 0
    %1139 = vmatpush1.bf16.msra.mxu0 0
    %1140 = vmatprep.subr.bf16.mxu0 0
    %1141 = vmatpush1.bf16.msra.mxu0 0
    %1142 = vmatprep.subr.bf16.mxu0 0
    %1143 = vmatpush1.bf16.msra.mxu0 0
    %1144 = vmatprep.subr.bf16.mxu0 0
    %1145 = vmatpush1.bf16.msra.mxu0 0
    %1146 = vmatprep.subr.bf16.mxu0 0
    %1147 = vmatpush1.bf16.msra.mxu0 0
    %1148 = vmatprep.subr.bf16.mxu0 0
    %1149 = vmatpush1.bf16.msra.mxu0 0
    %1150 = vmatprep.mubr.bf16.mxu0 0
    %1151 = vmatmul.mubr.bf16.gmra.mrb[0].mxu0 %v1113
    %v1152 = vpop.f32.mrb[0].mxu0
    %v1153 = vadd.f32 0.0, %v1152
    %v1154 = vpop.f32.mrb[0].mxu0
    %v1155 = vpop.f32.mrb[0].mxu0
    %v1156 = vpop.f32.mrb[0].mxu0
    %1157 = vdwg.mxu0
    %v1159 = vsel %vm337, %v1060, 0
    %v1162 = vsel %vm586, %v1064, 0
    %1164 = vmatprep.subr.bf16.mxu0 0
    %1165 = vmatpush1.bf16.msra.mxu0 %v1162
    %1166 = vmatprep.subr.bf16.mxu0 0
    %1167 = vmatpush1.bf16.msra.mxu0 0
    %1168 = vmatprep.subr.bf16.mxu0 0
    %1169 = vmatpush1.bf16.msra.mxu0 0
    %1170 = vmatprep.subr.bf16.mxu0 0
    %1171 = vmatpush1.bf16.msra.mxu0 0
    %1172 = vmatprep.subr.bf16.mxu0 0
    %1173 = vmatpush1.bf16.msra.mxu0 0
    %1174 = vmatprep.subr.bf16.mxu0 0
    %1175 = vmatpush1.bf16.msra.mxu0 0
    %1176 = vmatprep.subr.bf16.mxu0 0
    %1177 = vmatpush1.bf16.msra.mxu0 0
    %1178 = vmatprep.subr.bf16.mxu0 0
    %1179 = vmatpush1.bf16.msra.mxu0 0
    %1180 = vmatprep.subr.bf16.mxu0 0
    %1181 = vmatpush1.bf16.msra.mxu0 0
    %1182 = vmatprep.subr.bf16.mxu0 0
    %1183 = vmatpush1.bf16.msra.mxu0 0
    %1184 = vmatprep.subr.bf16.mxu0 0
    %1185 = vmatpush1.bf16.msra.mxu0 0
    %1186 = vmatprep.subr.bf16.mxu0 0
    %1187 = vmatpush1.bf16.msra.mxu0 0
    %1188 = vmatprep.subr.bf16.mxu0 0
    %1189 = vmatpush1.bf16.msra.mxu0 0
    %1190 = vmatprep.subr.bf16.mxu0 0
    %1191 = vmatpush1.bf16.msra.mxu0 0
    %1192 = vmatprep.subr.bf16.mxu0 0
    %1193 = vmatpush1.bf16.msra.mxu0 0
    %1194 = vmatprep.subr.bf16.mxu0 0
    %1195 = vmatpush1.bf16.msra.mxu0 0
    %1196 = vmatprep.mubr.bf16.mxu0 0
    %1197 = vmatmul.mubr.bf16.gmra.mrb[0].mxu0 %v1159
    %v1198 = vpop.f32.mrb[0].mxu0
    %v1199 = vadd.f32 0.0, %v1198
    %v1200 = vpop.f32.mrb[0].mxu0
    %v1201 = vpop.f32.mrb[0].mxu0
    %v1202 = vpop.f32.mrb[0].mxu0
    %1203 = vdwg.mxu0
    %v1205 = vsel %vm337, %v1061, 0
    %v1208 = vsel %vm586, %v1065, 0
    %1210 = vmatprep.subr.bf16.mxu0 0
    %1211 = vmatpush1.bf16.msra.mxu0 %v1208
    %1212 = vmatprep.subr.bf16.mxu0 0
    %1213 = vmatpush1.bf16.msra.mxu0 0
    %1214 = vmatprep.subr.bf16.mxu0 0
    %1215 = vmatpush1.bf16.msra.mxu0 0
    %1216 = vmatprep.subr.bf16.mxu0 0
    %1217 = vmatpush1.bf16.msra.mxu0 0
    %1218 = vmatprep.subr.bf16.mxu0 0
    %1219 = vmatpush1.bf16.msra.mxu0 0
    %1220 = vmatprep.subr.bf16.mxu0 0
    %1221 = vmatpush1.bf16.msra.mxu0 0
    %1222 = vmatprep.subr.bf16.mxu0 0
    %1223 = vmatpush1.bf16.msra.mxu0 0
    %1224 = vmatprep.subr.bf16.mxu0 0
    %1225 = vmatpush1.bf16.msra.mxu0 0
    %1226 = vmatprep.subr.bf16.mxu0 0
    %1227 = vmatpush1.bf16.msra.mxu0 0
    %1228 = vmatprep.subr.bf16.mxu0 0
    %1229 = vmatpush1.bf16.msra.mxu0 0
    %1230 = vmatprep.subr.bf16.mxu0 0
    %1231 = vmatpush1.bf16.msra.mxu0 0
    %1232 = vmatprep.subr.bf16.mxu0 0
    %1233 = vmatpush1.bf16.msra.mxu0 0
    %1234 = vmatprep.subr.bf16.mxu0 0
    %1235 = vmatpush1.bf16.msra.mxu0 0
    %1236 = vmatprep.subr.bf16.mxu0 0
    %1237 = vmatpush1.bf16.msra.mxu0 0
    %1238 = vmatprep.subr.bf16.mxu0 0
    %1239 = vmatpush1.bf16.msra.mxu0 0
    %1240 = vmatprep.subr.bf16.mxu0 0
    %1241 = vmatpush1.bf16.msra.mxu0 0
    %1242 = vmatprep.mubr.bf16.mxu0 0
    %1243 = vmatmul.mubr.bf16.gmra.mrb[0].mxu0 %v1205
    %v1244 = vpop.f32.mrb[0].mxu0
    %v1245 = vadd.f32 0.0, %v1244
    %v1246 = vpop.f32.mrb[0].mxu0
    %v1247 = vpop.f32.mrb[0].mxu0
    %v1248 = vpop.f32.mrb[0].mxu0
    %1249 = vdwg.mxu0
    %1251 = vrot.lane.b32.xlu0 %v1153, 8
    %v1252 = vpop.permute.xlu0 %1251
    %1255 = vrot.lane.b32.xlu0 %v1199, 16
    %v1256 = vpop.permute.xlu0 %1255
    %1259 = vrot.lane.b32.xlu0 %v1245, 24
    %v1260 = vpop.permute.xlu0 %1259
    %v1262 = vsel %vm337, %v1107, %v1252
    %v1263 = vsel %vm781, %v1262, %v1256
    %v1264 = vsel %vm783, %v1263, %v1260
    %v1265 = vpack.c.bf16 %v1264, %v784
    %v1266 = vld [vmem:[#allocation15] sm:$0xff]
    %v1267 = vld [vmem:[#allocation15 + $0x8] sm:$0xff]
    %v1268 = vld [vmem:[#allocation15 + $0x10] sm:$0xff]
    %v1269 = vld [vmem:[#allocation15 + $0x18] sm:$0xff]
    %v1270 = vpack.c.bf16 %v1267, %v1266
    %v1271 = vpack.c.bf16 %v1269, %v1268
    %v1273 = vsel %vm146, %v1265, 0
    %1275 = vmatprep.subr.bf16.mxu0 0
    %1276 = vmatpush1.bf16.msra.mxu0 %v1270
    %1277 = vmatprep.subr.bf16.mxu0 0
    %1278 = vmatpush1.bf16.msra.mxu0 %v1271
    %1279 = vmatprep.subr.bf16.mxu0 0
    %1280 = vmatpush1.bf16.msra.mxu0 0
    %1281 = vmatprep.subr.bf16.mxu0 0
    %1282 = vmatpush1.bf16.msra.mxu0 0
    %1283 = vmatprep.subr.bf16.mxu0 0
    %1284 = vmatpush1.bf16.msra.mxu0 0
    %1285 = vmatprep.subr.bf16.mxu0 0
    %1286 = vmatpush1.bf16.msra.mxu0 0
    %1287 = vmatprep.subr.bf16.mxu0 0
    %1288 = vmatpush1.bf16.msra.mxu0 0
    %1289 = vmatprep.subr.bf16.mxu0 0
    %1290 = vmatpush1.bf16.msra.mxu0 0
    %1291 = vmatprep.subr.bf16.mxu0 0
    %1292 = vmatpush1.bf16.msra.mxu0 0
    %1293 = vmatprep.subr.bf16.mxu0 0
    %1294 = vmatpush1.bf16.msra.mxu0 0
    %1295 = vmatprep.subr.bf16.mxu0 0
    %1296 = vmatpush1.bf16.msra.mxu0 0
    %1297 = vmatprep.subr.bf16.mxu0 0
    %1298 = vmatpush1.bf16.msra.mxu0 0
    %1299 = vmatprep.subr.bf16.mxu0 0
    %1300 = vmatpush1.bf16.msra.mxu0 0
    %1301 = vmatprep.subr.bf16.mxu0 0
    %1302 = vmatpush1.bf16.msra.mxu0 0
    %1303 = vmatprep.subr.bf16.mxu0 0
    %1304 = vmatpush1.bf16.msra.mxu0 0
    %1305 = vmatprep.subr.bf16.mxu0 0
    %1306 = vmatpush1.bf16.msra.mxu0 0
    %1307 = vmatprep.mubr.bf16.mxu0 0
    %1308 = vmatmul.mubr.bf16.gmra.mrb[0].mxu0 %v1273
    %v1309 = vpop.f32.mrb[0].mxu0
    %v1310 = vadd.f32 0.0, %v1309
    %v1311 = vpop.f32.mrb[0].mxu0
    %v1312 = vpop.f32.mrb[0].mxu0
    %v1313 = vadd.f32 0.0, %v1312
    %v1314 = vpop.f32.mrb[0].mxu0
    %1315 = vdwg.mxu0
    %1316 = vst.msk [vmem:[#allocation16] sm:$0xff] %vm146, %v1310
    %1317 = vst.msk [vmem:[#allocation16 + $0x8] sm:$0xff] %vm146, %v1313
    // Predicated region
    $region66: #{tpu_custom_call.1} parent=1 // pred_check
      _
    $region67: #{tpu_custom_call.1} parent=1 // pred_check_branch
      %1319 = sbr.rel (0) target = $region69
    $region68: #{tpu_custom_call.1} parent=1 // pred_region
      %s1321 = ssub.s32 256, 256
      %1322 = vsyncadd [#allocation4], %s1321
      %s1323 = sshll.u32 [#allocation16], 4
      %s1324 = int_to_ptr.vmem [resolvable:$true] %s1323
      %1329 = dma.vmem_to_hbm [thread:$0]  %s1324, 256, %s8, [#allocation4], 128, 128, 8
    $region69: #{tpu_custom_call.1} parent=1 // pred_fallthru
      _
    // Predicated region
    $region70: #{tpu_custom_call.1} parent=1 // pred_check
      _
    $region71: #{tpu_custom_call.1} parent=1 // pred_check_branch
      %1331 = sbr.rel (0) target = $region73
    $region72: #{tpu_custom_call.1} parent=1 // pred_region
      %1332 = dma.done [#allocation4], 256
    $region73: #{tpu_custom_call.1} parent=1 // pred_fallthru
      _
    %1333 = vsyncpa [#allocation3], 1
    %1334 = vsyncpa [#allocation8], 1
    %1335 = vsyncpa [#allocation11], 1
    %1336 = vsyncpa [#allocation14], 1
    %1337 = vsyncpa [#allocation4], 1
    %1338 = vsyncpa [#allocation5], 1

</llo_original>
